<compile_context>
chip_gen: v7x
topology: tpu7x:2x2x1
jax: 0.10.0
libtpu: 0.0.40
codegen_flags: <defaults>
</compile_context>

<pallas_src>
import jax
import jax.numpy as jnp
from jax import lax
from jax.experimental import pallas as pl
from jax.experimental.pallas import tpu as pltpu


BP = 8     # padded batch (sublane-dense)
CP = 128   # padded num_classes (lane-dense output store)


# -----------------------------------------------------------------------------
# Pallas kernel: SMEM-token gather from folded table + stacked recurrence + fc.
# -----------------------------------------------------------------------------
def rnn_fc_kernel(tok_ref,       # (B, T)   int32, SMEM   token ids
                  emb_proj_ref,  # (V, H)   f32,  VMEM    embedding@W_ih0^T + b0 (folded)
                  w_hh0_ref,     # (H, H)   bf16          layer-0 hidden weights (pre-T)
                  w_ih1_ref,     # (H, H)   bf16          layer-1 input weights (pre-T)
                  w_hh1_ref,     # (H, H)   bf16          layer-1 hidden weights (pre-T)
                  b1_ref,        # (BP, H)  f32           layer-1 bias, pre-broadcast
                  w_fc_ref,      # (H, CP)  bf16          fc weights (pre-T, zero-pad cols)
                  b_fc_ref,      # (BP, CP) f32           fc bias, pre-broadcast / padded
                  out_ref,       # (BP, CP) f32           padded logits
                  pre0_ref):     # (T*BP, H) f32 scratch  gathered layer-0 pre-activations
    B, T = tok_ref.shape
    Bp, H = b1_ref.shape

    # Padded batch rows are never gathered; zero the scratch once so they stay
    # finite (they only ever feed padded output rows, sliced off outside).
    pre0_ref[...] = jnp.zeros_like(pre0_ref)

    # Embedding gather: emb_proj already contains x_t @ W_ih0^T + b_ih0 + b_hh0,
    # so these T*B row copies replace the former hoisted matmul entirely.
    for t in range(T):
        for b in range(B):
            tok = tok_ref[b, t]                                   # SMEM scalar
            pre0_ref[pl.ds(t * Bp + b, 1), :] = emb_proj_ref[pl.ds(tok, 1), :]

    w_hh0 = w_hh0_ref[...]
    w_ih1 = w_ih1_ref[...]
    w_hh1 = w_hh1_ref[...]
    b1 = b1_ref[...]

    def step(t, carry):
        h0, h1 = carry
        # h1 @ W_hh1 depends only on the previous step's h1: issue it ahead of
        # the layer-0 chain so its MXU push overlaps layer-0's matmul + tanh.
        h1_rec = jnp.dot(h1.astype(jnp.bfloat16), w_hh1,
                         preferred_element_type=jnp.float32)
        pre0_t = pre0_ref[pl.ds(pl.multiple_of(t * Bp, Bp), Bp), :]
        # layer 0: single (BP,H)@(H,H) bf16 matmul on the serial critical path.
        h0 = jnp.tanh(pre0_t + jnp.dot(h0.astype(jnp.bfloat16), w_hh0,
                                       preferred_element_type=jnp.float32))
        # layer 1: un-fused input matmul + previously issued hidden matmul.
        h1 = jnp.tanh(jnp.dot(h0.astype(jnp.bfloat16), w_ih1,
                              preferred_element_type=jnp.float32)
                      + h1_rec + b1)
        return (h0, h1)

    h0 = jnp.zeros((Bp, H), jnp.float32)
    h1 = jnp.zeros((Bp, H), jnp.float32)
    h0, h1 = lax.fori_loop(0, T, step, (h0, h1), unroll=True)

    # fc on the last time step's top-layer hidden state (lane-dense CP store).
    out_ref[...] = (jnp.dot(h1.astype(jnp.bfloat16), w_fc_ref[...],
                            preferred_element_type=jnp.float32)
                    + b_fc_ref[...])


# -----------------------------------------------------------------------------
# One-time parameter preparation (embedding folding, transposes, bias folding,
# bf16 casts, padding).  Done ONCE per model, never per forward call.
# -----------------------------------------------------------------------------
def prepare_kernel_params(params):
    H = params["w_hh0"].shape[0]
    C = params["w_fc"].shape[0]
    assert C <= CP

    # Fold Embedding -> layer-0 input projection (both linear) into one table.
    emb_proj = (params["embedding"] @ params["w_ih0"].T
                + params["b_ih0"] + params["b_hh0"]).astype(jnp.float32)   # (V, H)

    b1 = jnp.broadcast_to((params["b_ih1"] + params["b_hh1"])[None, :],
                          (BP, H)).astype(jnp.float32)

    w_fc = jnp.zeros((H, CP), jnp.bfloat16).at[:, :C].set(
        params["w_fc"].T.astype(jnp.bfloat16))
    b_fc = jnp.zeros((BP, CP), jnp.float32).at[:, :C].set(
        jnp.broadcast_to(params["b_fc"][None, :], (BP, C)).astype(jnp.float32))

    return {
        "emb_proj": emb_proj,
        "w_hh0": params["w_hh0"].T.astype(jnp.bfloat16),
        "w_ih1": params["w_ih1"].T.astype(jnp.bfloat16),
        "w_hh1": params["w_hh1"].T.astype(jnp.bfloat16),
        "b1": b1,
        "w_fc": w_fc,
        "b_fc": b_fc,
    }


# -----------------------------------------------------------------------------
# Wrapper: tokens go straight into the kernel (SMEM); no gather/transpose/pad
# HLOs outside the kernel anymore.
# -----------------------------------------------------------------------------
def rnn_model_forward(tokens, kparams, *, num_classes):
    """tokens: (B, T) int.  Returns (B, num_classes) float32."""
    B, T = tokens.shape
    H = kparams["w_hh0"].shape[0]
    assert B <= BP and num_classes <= CP
    tokens = tokens.astype(jnp.int32)

    args = (tokens, kparams["emb_proj"], kparams["w_hh0"], kparams["w_ih1"],
            kparams["w_hh1"], kparams["b1"], kparams["w_fc"], kparams["b_fc"])

    smem_spec = pl.BlockSpec(memory_space=pltpu.MemorySpace.SMEM)
    vmem = lambda a: pl.BlockSpec(a.shape, lambda: (0,) * a.ndim,
                                  memory_space=pltpu.MemorySpace.VMEM)

    out_pad = pl.pallas_call(
        rnn_fc_kernel,
        out_shape=jax.ShapeDtypeStruct((BP, CP), jnp.float32),
        in_specs=[smem_spec] + [vmem(a) for a in args[1:]],
        out_specs=pl.BlockSpec((BP, CP), lambda: (0, 0),
                               memory_space=pltpu.MemorySpace.VMEM),
        scratch_shapes=[pltpu.VMEM((T * BP, H), jnp.float32)],
    )(*args)

    return out_pad[:B, :num_classes]


# -----------------------------------------------------------------------------
# Pure-JAX f32 reference (same math, original layout) for a sanity check.
# -----------------------------------------------------------------------------
def rnn_model_reference(tokens, params):
    emb = params["embedding"]
    x = jnp.take(emb, tokens, axis=0)            # (B, T, E)
    B, T, _ = x.shape
    H = params["w_hh0"].shape[0]
    h0 = jnp.zeros((B, H), jnp.float32)
    h1 = jnp.zeros((B, H), jnp.float32)
    for t in range(T):
        x_t = x[:, t, :]
        h0 = jnp.tanh(x_t @ params["w_ih0"].T + params["b_ih0"]
                      + h0 @ params["w_hh0"].T + params["b_hh0"])
        h1 = jnp.tanh(h0 @ params["w_ih1"].T + params["b_ih1"]
                      + h1 @ params["w_hh1"].T + params["b_hh1"])
    return h1 @ params["w_fc"].T + params["b_fc"]


def init_params(key, vocab_size, embedding_dim, hidden_dim, num_classes):
    ks = jax.random.split(key, 12)
    u = lambda k, shape, s: jax.random.uniform(k, shape, jnp.float32, -s, s)
    s_rnn = 1.0 / jnp.sqrt(hidden_dim)
    s_fc = 1.0 / jnp.sqrt(hidden_dim)
    return {
        "embedding": jax.random.normal(ks[0], (vocab_size, embedding_dim), jnp.float32),
        # RNN layer 0
        "w_ih0": u(ks[1], (hidden_dim, embedding_dim), s_rnn),
        "w_hh0": u(ks[2], (hidden_dim, hidden_dim), s_rnn),
        "b_ih0": u(ks[3], (hidden_dim,), s_rnn),
        "b_hh0": u(ks[4], (hidden_dim,), s_rnn),
        # RNN layer 1
        "w_ih1": u(ks[5], (hidden_dim, hidden_dim), s_rnn),
        "w_hh1": u(ks[6], (hidden_dim, hidden_dim), s_rnn),
        "b_ih1": u(ks[7], (hidden_dim,), s_rnn),
        "b_hh1": u(ks[8], (hidden_dim,), s_rnn),
        # fc
        "w_fc": u(ks[9], (num_classes, hidden_dim), s_fc),
        "b_fc": u(ks[10], (num_classes,), s_fc),
    }


if __name__ == "__main__":
    # Small shapes consistent with the module (embedding_dim=100, hidden_dim=128,
    # num_layers=2, num_classes=1); vocab is synthetic since word_count is empty.
    batch, seq = 2, 8
    vocab_size, embedding_dim, hidden_dim, num_classes = 50, 100, 128, 1

    key = jax.random.PRNGKey(0)
    k_params, k_tokens = jax.random.split(key)
    params = init_params(k_params, vocab_size, embedding_dim, hidden_dim, num_classes)
    tokens = jax.random.randint(k_tokens, (batch, seq), 0, vocab_size, dtype=jnp.int32)

    # One-time weight prep (embedding folding, transposes, bias folding, bf16).
    kparams = prepare_kernel_params(params)

    forward = jax.jit(rnn_model_forward, static_argnames="num_classes")
    out = jax.block_until_ready(forward(tokens, kparams, num_classes=num_classes))
    ref = jax.block_until_ready(rnn_model_reference(tokens, params))

    assert out.shape == (batch, num_classes), out.shape
    # Matmul operands are bf16 (native MXU input) with f32 accumulation and an
    # f32 carried hidden state / additive path -> compare at bf16-appropriate
    # tolerance against the pure-f32 reference.
    assert jnp.allclose(out, ref, atol=2e-2, rtol=2e-2), (out, ref)
    print("KERNEL_OK")
</pallas_src>

<mosaic_0001>
module attributes {stable_mosaic.version = 11 : i64} {
  func.func @rnn_fc_kernel(%arg0: memref<2x8xi32, #tpu.memory_space<smem>>, %arg1: memref<50x128xf32, #tpu.memory_space<vmem>>, %arg2: memref<128x128xbf16, #tpu.memory_space<vmem>>, %arg3: memref<128x128xbf16, #tpu.memory_space<vmem>>, %arg4: memref<128x128xbf16, #tpu.memory_space<vmem>>, %arg5: memref<8x128xf32, #tpu.memory_space<vmem>>, %arg6: memref<128x128xbf16, #tpu.memory_space<vmem>>, %arg7: memref<8x128xf32, #tpu.memory_space<vmem>>, %arg8: memref<8x128xf32, #tpu.memory_space<vmem>>, %arg9: memref<64x128xf32, #tpu.memory_space<vmem>>) attributes {dimension_semantics = [], scalar_prefetch = 0 : i64, scratch_operands = 1 : i64, tpu.core_type = #tpu.core_type<tc>} {
    %cst = arith.constant 0.000000e+00 : f32
    %0 = vector.broadcast %cst : f32 to vector<64x128xf32>
    %c0 = arith.constant 0 : index
    %c0_0 = arith.constant 0 : index
    %1 = vector.load %arg9[%c0, %c0_0] : memref<64x128xf32, #tpu.memory_space<vmem>>, vector<64x128xf32>
    tpu.vector_store %arg9[%c0, %c0_0], %0 {strides = array<i32>} : memref<64x128xf32, #tpu.memory_space<vmem>>, vector<64x128xf32>,
    %c0_1 = arith.constant 0 : index
    %c0_2 = arith.constant 0 : index
    %2 = memref.load %arg0[%c0_1, %c0_2] : memref<2x8xi32, #tpu.memory_space<smem>>
    %3 = arith.index_cast %2 : i32 to index
    %c0_3 = arith.constant 0 : index
    %4 = vector.load %arg1[%3, %c0_3] : memref<50x128xf32, #tpu.memory_space<vmem>>, vector<1x128xf32>
    %c0_4 = arith.constant 0 : index
    %c0_5 = arith.constant 0 : index
    %5 = vector.load %arg9[%c0_4, %c0_5] : memref<64x128xf32, #tpu.memory_space<vmem>>, vector<1x128xf32>
    tpu.vector_store %arg9[%c0_4, %c0_5], %4 {strides = array<i32>} : memref<64x128xf32, #tpu.memory_space<vmem>>, vector<1x128xf32>,
    %c1 = arith.constant 1 : index
    %c0_6 = arith.constant 0 : index
    %6 = memref.load %arg0[%c1, %c0_6] : memref<2x8xi32, #tpu.memory_space<smem>>
    %7 = arith.index_cast %6 : i32 to index
    %c0_7 = arith.constant 0 : index
    %8 = vector.load %arg1[%7, %c0_7] : memref<50x128xf32, #tpu.memory_space<vmem>>, vector<1x128xf32>
    %c1_8 = arith.constant 1 : index
    %c0_9 = arith.constant 0 : index
    %9 = vector.load %arg9[%c1_8, %c0_9] : memref<64x128xf32, #tpu.memory_space<vmem>>, vector<1x128xf32>
    tpu.vector_store %arg9[%c1_8, %c0_9], %8 {strides = array<i32>} : memref<64x128xf32, #tpu.memory_space<vmem>>, vector<1x128xf32>,
    %c0_10 = arith.constant 0 : index
    %c1_11 = arith.constant 1 : index
    %10 = memref.load %arg0[%c0_10, %c1_11] : memref<2x8xi32, #tpu.memory_space<smem>>
    %11 = arith.index_cast %10 : i32 to index
    %c0_12 = arith.constant 0 : index
    %12 = vector.load %arg1[%11, %c0_12] : memref<50x128xf32, #tpu.memory_space<vmem>>, vector<1x128xf32>
    %c8 = arith.constant 8 : index
    %c0_13 = arith.constant 0 : index
    %13 = vector.load %arg9[%c8, %c0_13] : memref<64x128xf32, #tpu.memory_space<vmem>>, vector<1x128xf32>
    tpu.vector_store %arg9[%c8, %c0_13], %12 {strides = array<i32>} : memref<64x128xf32, #tpu.memory_space<vmem>>, vector<1x128xf32>,
    %c1_14 = arith.constant 1 : index
    %c1_15 = arith.constant 1 : index
    %14 = memref.load %arg0[%c1_14, %c1_15] : memref<2x8xi32, #tpu.memory_space<smem>>
    %15 = arith.index_cast %14 : i32 to index
    %c0_16 = arith.constant 0 : index
    %16 = vector.load %arg1[%15, %c0_16] : memref<50x128xf32, #tpu.memory_space<vmem>>, vector<1x128xf32>
    %c9 = arith.constant 9 : index
    %c0_17 = arith.constant 0 : index
    %17 = vector.load %arg9[%c9, %c0_17] : memref<64x128xf32, #tpu.memory_space<vmem>>, vector<1x128xf32>
    tpu.vector_store %arg9[%c9, %c0_17], %16 {strides = array<i32>} : memref<64x128xf32, #tpu.memory_space<vmem>>, vector<1x128xf32>,
    %c0_18 = arith.constant 0 : index
    %c2 = arith.constant 2 : index
    %18 = memref.load %arg0[%c0_18, %c2] : memref<2x8xi32, #tpu.memory_space<smem>>
    %19 = arith.index_cast %18 : i32 to index
    %c0_19 = arith.constant 0 : index
    %20 = vector.load %arg1[%19, %c0_19] : memref<50x128xf32, #tpu.memory_space<vmem>>, vector<1x128xf32>
    %c16 = arith.constant 16 : index
    %c0_20 = arith.constant 0 : index
    %21 = vector.load %arg9[%c16, %c0_20] : memref<64x128xf32, #tpu.memory_space<vmem>>, vector<1x128xf32>
    tpu.vector_store %arg9[%c16, %c0_20], %20 {strides = array<i32>} : memref<64x128xf32, #tpu.memory_space<vmem>>, vector<1x128xf32>,
    %c1_21 = arith.constant 1 : index
    %c2_22 = arith.constant 2 : index
    %22 = memref.load %arg0[%c1_21, %c2_22] : memref<2x8xi32, #tpu.memory_space<smem>>
    %23 = arith.index_cast %22 : i32 to index
    %c0_23 = arith.constant 0 : index
    %24 = vector.load %arg1[%23, %c0_23] : memref<50x128xf32, #tpu.memory_space<vmem>>, vector<1x128xf32>
    %c17 = arith.constant 17 : index
    %c0_24 = arith.constant 0 : index
    %25 = vector.load %arg9[%c17, %c0_24] : memref<64x128xf32, #tpu.memory_space<vmem>>, vector<1x128xf32>
    tpu.vector_store %arg9[%c17, %c0_24], %24 {strides = array<i32>} : memref<64x128xf32, #tpu.memory_space<vmem>>, vector<1x128xf32>,
    %c0_25 = arith.constant 0 : index
    %c3 = arith.constant 3 : index
    %26 = memref.load %arg0[%c0_25, %c3] : memref<2x8xi32, #tpu.memory_space<smem>>
    %27 = arith.index_cast %26 : i32 to index
    %c0_26 = arith.constant 0 : index
    %28 = vector.load %arg1[%27, %c0_26] : memref<50x128xf32, #tpu.memory_space<vmem>>, vector<1x128xf32>
    %c24 = arith.constant 24 : index
    %c0_27 = arith.constant 0 : index
    %29 = vector.load %arg9[%c24, %c0_27] : memref<64x128xf32, #tpu.memory_space<vmem>>, vector<1x128xf32>
    tpu.vector_store %arg9[%c24, %c0_27], %28 {strides = array<i32>} : memref<64x128xf32, #tpu.memory_space<vmem>>, vector<1x128xf32>,
    %c1_28 = arith.constant 1 : index
    %c3_29 = arith.constant 3 : index
    %30 = memref.load %arg0[%c1_28, %c3_29] : memref<2x8xi32, #tpu.memory_space<smem>>
    %31 = arith.index_cast %30 : i32 to index
    %c0_30 = arith.constant 0 : index
    %32 = vector.load %arg1[%31, %c0_30] : memref<50x128xf32, #tpu.memory_space<vmem>>, vector<1x128xf32>
    %c25 = arith.constant 25 : index
    %c0_31 = arith.constant 0 : index
    %33 = vector.load %arg9[%c25, %c0_31] : memref<64x128xf32, #tpu.memory_space<vmem>>, vector<1x128xf32>
    tpu.vector_store %arg9[%c25, %c0_31], %32 {strides = array<i32>} : memref<64x128xf32, #tpu.memory_space<vmem>>, vector<1x128xf32>,
    %c0_32 = arith.constant 0 : index
    %c4 = arith.constant 4 : index
    %34 = memref.load %arg0[%c0_32, %c4] : memref<2x8xi32, #tpu.memory_space<smem>>
    %35 = arith.index_cast %34 : i32 to index
    %c0_33 = arith.constant 0 : index
    %36 = vector.load %arg1[%35, %c0_33] : memref<50x128xf32, #tpu.memory_space<vmem>>, vector<1x128xf32>
    %c32 = arith.constant 32 : index
    %c0_34 = arith.constant 0 : index
    %37 = vector.load %arg9[%c32, %c0_34] : memref<64x128xf32, #tpu.memory_space<vmem>>, vector<1x128xf32>
    tpu.vector_store %arg9[%c32, %c0_34], %36 {strides = array<i32>} : memref<64x128xf32, #tpu.memory_space<vmem>>, vector<1x128xf32>,
    %c1_35 = arith.constant 1 : index
    %c4_36 = arith.constant 4 : index
    %38 = memref.load %arg0[%c1_35, %c4_36] : memref<2x8xi32, #tpu.memory_space<smem>>
    %39 = arith.index_cast %38 : i32 to index
    %c0_37 = arith.constant 0 : index
    %40 = vector.load %arg1[%39, %c0_37] : memref<50x128xf32, #tpu.memory_space<vmem>>, vector<1x128xf32>
    %c33 = arith.constant 33 : index
    %c0_38 = arith.constant 0 : index
    %41 = vector.load %arg9[%c33, %c0_38] : memref<64x128xf32, #tpu.memory_space<vmem>>, vector<1x128xf32>
    tpu.vector_store %arg9[%c33, %c0_38], %40 {strides = array<i32>} : memref<64x128xf32, #tpu.memory_space<vmem>>, vector<1x128xf32>,
    %c0_39 = arith.constant 0 : index
    %c5 = arith.constant 5 : index
    %42 = memref.load %arg0[%c0_39, %c5] : memref<2x8xi32, #tpu.memory_space<smem>>
    %43 = arith.index_cast %42 : i32 to index
    %c0_40 = arith.constant 0 : index
    %44 = vector.load %arg1[%43, %c0_40] : memref<50x128xf32, #tpu.memory_space<vmem>>, vector<1x128xf32>
    %c40 = arith.constant 40 : index
    %c0_41 = arith.constant 0 : index
    %45 = vector.load %arg9[%c40, %c0_41] : memref<64x128xf32, #tpu.memory_space<vmem>>, vector<1x128xf32>
    tpu.vector_store %arg9[%c40, %c0_41], %44 {strides = array<i32>} : memref<64x128xf32, #tpu.memory_space<vmem>>, vector<1x128xf32>,
    %c1_42 = arith.constant 1 : index
    %c5_43 = arith.constant 5 : index
    %46 = memref.load %arg0[%c1_42, %c5_43] : memref<2x8xi32, #tpu.memory_space<smem>>
    %47 = arith.index_cast %46 : i32 to index
    %c0_44 = arith.constant 0 : index
    %48 = vector.load %arg1[%47, %c0_44] : memref<50x128xf32, #tpu.memory_space<vmem>>, vector<1x128xf32>
    %c41 = arith.constant 41 : index
    %c0_45 = arith.constant 0 : index
    %49 = vector.load %arg9[%c41, %c0_45] : memref<64x128xf32, #tpu.memory_space<vmem>>, vector<1x128xf32>
    tpu.vector_store %arg9[%c41, %c0_45], %48 {strides = array<i32>} : memref<64x128xf32, #tpu.memory_space<vmem>>, vector<1x128xf32>,
    %c0_46 = arith.constant 0 : index
    %c6 = arith.constant 6 : index
    %50 = memref.load %arg0[%c0_46, %c6] : memref<2x8xi32, #tpu.memory_space<smem>>
    %51 = arith.index_cast %50 : i32 to index
    %c0_47 = arith.constant 0 : index
    %52 = vector.load %arg1[%51, %c0_47] : memref<50x128xf32, #tpu.memory_space<vmem>>, vector<1x128xf32>
    %c48 = arith.constant 48 : index
    %c0_48 = arith.constant 0 : index
    %53 = vector.load %arg9[%c48, %c0_48] : memref<64x128xf32, #tpu.memory_space<vmem>>, vector<1x128xf32>
    tpu.vector_store %arg9[%c48, %c0_48], %52 {strides = array<i32>} : memref<64x128xf32, #tpu.memory_space<vmem>>, vector<1x128xf32>,
    %c1_49 = arith.constant 1 : index
    %c6_50 = arith.constant 6 : index
    %54 = memref.load %arg0[%c1_49, %c6_50] : memref<2x8xi32, #tpu.memory_space<smem>>
    %55 = arith.index_cast %54 : i32 to index
    %c0_51 = arith.constant 0 : index
    %56 = vector.load %arg1[%55, %c0_51] : memref<50x128xf32, #tpu.memory_space<vmem>>, vector<1x128xf32>
    %c49 = arith.constant 49 : index
    %c0_52 = arith.constant 0 : index
    %57 = vector.load %arg9[%c49, %c0_52] : memref<64x128xf32, #tpu.memory_space<vmem>>, vector<1x128xf32>
    tpu.vector_store %arg9[%c49, %c0_52], %56 {strides = array<i32>} : memref<64x128xf32, #tpu.memory_space<vmem>>, vector<1x128xf32>,
    %c0_53 = arith.constant 0 : index
    %c7 = arith.constant 7 : index
    %58 = memref.load %arg0[%c0_53, %c7] : memref<2x8xi32, #tpu.memory_space<smem>>
    %59 = arith.index_cast %58 : i32 to index
    %c0_54 = arith.constant 0 : index
    %60 = vector.load %arg1[%59, %c0_54] : memref<50x128xf32, #tpu.memory_space<vmem>>, vector<1x128xf32>
    %c56 = arith.constant 56 : index
    %c0_55 = arith.constant 0 : index
    %61 = vector.load %arg9[%c56, %c0_55] : memref<64x128xf32, #tpu.memory_space<vmem>>, vector<1x128xf32>
    tpu.vector_store %arg9[%c56, %c0_55], %60 {strides = array<i32>} : memref<64x128xf32, #tpu.memory_space<vmem>>, vector<1x128xf32>,
    %c1_56 = arith.constant 1 : index
    %c7_57 = arith.constant 7 : index
    %62 = memref.load %arg0[%c1_56, %c7_57] : memref<2x8xi32, #tpu.memory_space<smem>>
    %63 = arith.index_cast %62 : i32 to index
    %c0_58 = arith.constant 0 : index
    %64 = vector.load %arg1[%63, %c0_58] : memref<50x128xf32, #tpu.memory_space<vmem>>, vector<1x128xf32>
    %c57 = arith.constant 57 : index
    %c0_59 = arith.constant 0 : index
    %65 = vector.load %arg9[%c57, %c0_59] : memref<64x128xf32, #tpu.memory_space<vmem>>, vector<1x128xf32>
    tpu.vector_store %arg9[%c57, %c0_59], %64 {strides = array<i32>} : memref<64x128xf32, #tpu.memory_space<vmem>>, vector<1x128xf32>,
    %c0_60 = arith.constant 0 : index
    %c0_61 = arith.constant 0 : index
    %66 = vector.load %arg2[%c0_60, %c0_61] : memref<128x128xbf16, #tpu.memory_space<vmem>>, vector<128x128xbf16>
    %c0_62 = arith.constant 0 : index
    %c0_63 = arith.constant 0 : index
    %67 = vector.load %arg3[%c0_62, %c0_63] : memref<128x128xbf16, #tpu.memory_space<vmem>>, vector<128x128xbf16>
    %c0_64 = arith.constant 0 : index
    %c0_65 = arith.constant 0 : index
    %68 = vector.load %arg4[%c0_64, %c0_65] : memref<128x128xbf16, #tpu.memory_space<vmem>>, vector<128x128xbf16>
    %c0_66 = arith.constant 0 : index
    %c0_67 = arith.constant 0 : index
    %69 = vector.load %arg5[%c0_66, %c0_67] : memref<8x128xf32, #tpu.memory_space<vmem>>, vector<8x128xf32>
    %cst_68 = arith.constant 0.000000e+00 : f32
    %70 = vector.broadcast %cst_68 : f32 to vector<8x128xf32>
    %cst_69 = arith.constant 0.000000e+00 : f32
    %71 = vector.broadcast %cst_69 : f32 to vector<8x128xf32>
    %c0_i32 = arith.constant 0 : i32
    %72 = arith.truncf %71 : vector<8x128xf32> to vector<8x128xbf16>
    %cst_70 = arith.constant dense<0.000000e+00> : vector<8x128xf32>
    %73 = tpu.matmul %72, %68, %cst_70 {dimension_numbers = #tpu.dot_dimension_numbers<[1], [0], [0], [1], [0, 0, 1, 1], [], []>} : vector<8x128xbf16>, vector<128x128xbf16>, vector<8x128xf32> -> vector<8x128xf32>
    %c8_i32 = arith.constant 8 : i32
    %74 = arith.muli %c0_i32, %c8_i32 : i32
    %75 = tpu.assume_multiple %74, 8 : i32
    %76 = arith.index_cast %75 : i32 to index
    %c0_71 = arith.constant 0 : index
    %77 = vector.load %arg9[%76, %c0_71] : memref<64x128xf32, #tpu.memory_space<vmem>>, vector<8x128xf32>
    %78 = arith.truncf %70 : vector<8x128xf32> to vector<8x128xbf16>
    %cst_72 = arith.constant dense<0.000000e+00> : vector<8x128xf32>
    %79 = tpu.matmul %78, %66, %cst_72 {dimension_numbers = #tpu.dot_dimension_numbers<[1], [0], [0], [1], [0, 0, 1, 1], [], []>} : vector<8x128xbf16>, vector<128x128xbf16>, vector<8x128xf32> -> vector<8x128xf32>
    %80 = arith.addf %77, %79 : vector<8x128xf32>
    %81 = math.tanh %80 : vector<8x128xf32>
    %82 = arith.truncf %81 : vector<8x128xf32> to vector<8x128xbf16>
    %cst_73 = arith.constant dense<0.000000e+00> : vector<8x128xf32>
    %83 = tpu.matmul %82, %67, %cst_73 {dimension_numbers = #tpu.dot_dimension_numbers<[1], [0], [0], [1], [0, 0, 1, 1], [], []>} : vector<8x128xbf16>, vector<128x128xbf16>, vector<8x128xf32> -> vector<8x128xf32>
    %84 = arith.addf %83, %73 : vector<8x128xf32>
    %85 = arith.addf %84, %69 : vector<8x128xf32>
    %86 = math.tanh %85 : vector<8x128xf32>
    %c1_i32 = arith.constant 1 : i32
    %87 = arith.truncf %86 : vector<8x128xf32> to vector<8x128xbf16>
    %cst_74 = arith.constant dense<0.000000e+00> : vector<8x128xf32>
    %88 = tpu.matmul %87, %68, %cst_74 {dimension_numbers = #tpu.dot_dimension_numbers<[1], [0], [0], [1], [0, 0, 1, 1], [], []>} : vector<8x128xbf16>, vector<128x128xbf16>, vector<8x128xf32> -> vector<8x128xf32>
    %c8_i32_75 = arith.constant 8 : i32
    %89 = arith.muli %c1_i32, %c8_i32_75 : i32
    %90 = tpu.assume_multiple %89, 8 : i32
    %91 = arith.index_cast %90 : i32 to index
    %c0_76 = arith.constant 0 : index
    %92 = vector.load %arg9[%91, %c0_76] : memref<64x128xf32, #tpu.memory_space<vmem>>, vector<8x128xf32>
    %93 = arith.truncf %81 : vector<8x128xf32> to vector<8x128xbf16>
    %cst_77 = arith.constant dense<0.000000e+00> : vector<8x128xf32>
    %94 = tpu.matmul %93, %66, %cst_77 {dimension_numbers = #tpu.dot_dimension_numbers<[1], [0], [0], [1], [0, 0, 1, 1], [], []>} : vector<8x128xbf16>, vector<128x128xbf16>, vector<8x128xf32> -> vector<8x128xf32>
    %95 = arith.addf %92, %94 : vector<8x128xf32>
    %96 = math.tanh %95 : vector<8x128xf32>
    %97 = arith.truncf %96 : vector<8x128xf32> to vector<8x128xbf16>
    %cst_78 = arith.constant dense<0.000000e+00> : vector<8x128xf32>
    %98 = tpu.matmul %97, %67, %cst_78 {dimension_numbers = #tpu.dot_dimension_numbers<[1], [0], [0], [1], [0, 0, 1, 1], [], []>} : vector<8x128xbf16>, vector<128x128xbf16>, vector<8x128xf32> -> vector<8x128xf32>
    %99 = arith.addf %98, %88 : vector<8x128xf32>
    %100 = arith.addf %99, %69 : vector<8x128xf32>
    %101 = math.tanh %100 : vector<8x128xf32>
    %c2_i32 = arith.constant 2 : i32
    %102 = arith.truncf %101 : vector<8x128xf32> to vector<8x128xbf16>
    %cst_79 = arith.constant dense<0.000000e+00> : vector<8x128xf32>
    %103 = tpu.matmul %102, %68, %cst_79 {dimension_numbers = #tpu.dot_dimension_numbers<[1], [0], [0], [1], [0, 0, 1, 1], [], []>} : vector<8x128xbf16>, vector<128x128xbf16>, vector<8x128xf32> -> vector<8x128xf32>
    %c8_i32_80 = arith.constant 8 : i32
    %104 = arith.muli %c2_i32, %c8_i32_80 : i32
    %105 = tpu.assume_multiple %104, 8 : i32
    %106 = arith.index_cast %105 : i32 to index
    %c0_81 = arith.constant 0 : index
    %107 = vector.load %arg9[%106, %c0_81] : memref<64x128xf32, #tpu.memory_space<vmem>>, vector<8x128xf32>
    %108 = arith.truncf %96 : vector<8x128xf32> to vector<8x128xbf16>
    %cst_82 = arith.constant dense<0.000000e+00> : vector<8x128xf32>
    %109 = tpu.matmul %108, %66, %cst_82 {dimension_numbers = #tpu.dot_dimension_numbers<[1], [0], [0], [1], [0, 0, 1, 1], [], []>} : vector<8x128xbf16>, vector<128x128xbf16>, vector<8x128xf32> -> vector<8x128xf32>
    %110 = arith.addf %107, %109 : vector<8x128xf32>
    %111 = math.tanh %110 : vector<8x128xf32>
    %112 = arith.truncf %111 : vector<8x128xf32> to vector<8x128xbf16>
    %cst_83 = arith.constant dense<0.000000e+00> : vector<8x128xf32>
    %113 = tpu.matmul %112, %67, %cst_83 {dimension_numbers = #tpu.dot_dimension_numbers<[1], [0], [0], [1], [0, 0, 1, 1], [], []>} : vector<8x128xbf16>, vector<128x128xbf16>, vector<8x128xf32> -> vector<8x128xf32>
    %114 = arith.addf %113, %103 : vector<8x128xf32>
    %115 = arith.addf %114, %69 : vector<8x128xf32>
    %116 = math.tanh %115 : vector<8x128xf32>
    %c3_i32 = arith.constant 3 : i32
    %117 = arith.truncf %116 : vector<8x128xf32> to vector<8x128xbf16>
    %cst_84 = arith.constant dense<0.000000e+00> : vector<8x128xf32>
    %118 = tpu.matmul %117, %68, %cst_84 {dimension_numbers = #tpu.dot_dimension_numbers<[1], [0], [0], [1], [0, 0, 1, 1], [], []>} : vector<8x128xbf16>, vector<128x128xbf16>, vector<8x128xf32> -> vector<8x128xf32>
    %c8_i32_85 = arith.constant 8 : i32
    %119 = arith.muli %c3_i32, %c8_i32_85 : i32
    %120 = tpu.assume_multiple %119, 8 : i32
    %121 = arith.index_cast %120 : i32 to index
    %c0_86 = arith.constant 0 : index
    %122 = vector.load %arg9[%121, %c0_86] : memref<64x128xf32, #tpu.memory_space<vmem>>, vector<8x128xf32>
    %123 = arith.truncf %111 : vector<8x128xf32> to vector<8x128xbf16>
    %cst_87 = arith.constant dense<0.000000e+00> : vector<8x128xf32>
    %124 = tpu.matmul %123, %66, %cst_87 {dimension_numbers = #tpu.dot_dimension_numbers<[1], [0], [0], [1], [0, 0, 1, 1], [], []>} : vector<8x128xbf16>, vector<128x128xbf16>, vector<8x128xf32> -> vector<8x128xf32>
    %125 = arith.addf %122, %124 : vector<8x128xf32>
    %126 = math.tanh %125 : vector<8x128xf32>
    %127 = arith.truncf %126 : vector<8x128xf32> to vector<8x128xbf16>
    %cst_88 = arith.constant dense<0.000000e+00> : vector<8x128xf32>
    %128 = tpu.matmul %127, %67, %cst_88 {dimension_numbers = #tpu.dot_dimension_numbers<[1], [0], [0], [1], [0, 0, 1, 1], [], []>} : vector<8x128xbf16>, vector<128x128xbf16>, vector<8x128xf32> -> vector<8x128xf32>
    %129 = arith.addf %128, %118 : vector<8x128xf32>
    %130 = arith.addf %129, %69 : vector<8x128xf32>
    %131 = math.tanh %130 : vector<8x128xf32>
    %c4_i32 = arith.constant 4 : i32
    %132 = arith.truncf %131 : vector<8x128xf32> to vector<8x128xbf16>
    %cst_89 = arith.constant dense<0.000000e+00> : vector<8x128xf32>
    %133 = tpu.matmul %132, %68, %cst_89 {dimension_numbers = #tpu.dot_dimension_numbers<[1], [0], [0], [1], [0, 0, 1, 1], [], []>} : vector<8x128xbf16>, vector<128x128xbf16>, vector<8x128xf32> -> vector<8x128xf32>
    %c8_i32_90 = arith.constant 8 : i32
    %134 = arith.muli %c4_i32, %c8_i32_90 : i32
    %135 = tpu.assume_multiple %134, 8 : i32
    %136 = arith.index_cast %135 : i32 to index
    %c0_91 = arith.constant 0 : index
    %137 = vector.load %arg9[%136, %c0_91] : memref<64x128xf32, #tpu.memory_space<vmem>>, vector<8x128xf32>
    %138 = arith.truncf %126 : vector<8x128xf32> to vector<8x128xbf16>
    %cst_92 = arith.constant dense<0.000000e+00> : vector<8x128xf32>
    %139 = tpu.matmul %138, %66, %cst_92 {dimension_numbers = #tpu.dot_dimension_numbers<[1], [0], [0], [1], [0, 0, 1, 1], [], []>} : vector<8x128xbf16>, vector<128x128xbf16>, vector<8x128xf32> -> vector<8x128xf32>
    %140 = arith.addf %137, %139 : vector<8x128xf32>
    %141 = math.tanh %140 : vector<8x128xf32>
    %142 = arith.truncf %141 : vector<8x128xf32> to vector<8x128xbf16>
    %cst_93 = arith.constant dense<0.000000e+00> : vector<8x128xf32>
    %143 = tpu.matmul %142, %67, %cst_93 {dimension_numbers = #tpu.dot_dimension_numbers<[1], [0], [0], [1], [0, 0, 1, 1], [], []>} : vector<8x128xbf16>, vector<128x128xbf16>, vector<8x128xf32> -> vector<8x128xf32>
    %144 = arith.addf %143, %133 : vector<8x128xf32>
    %145 = arith.addf %144, %69 : vector<8x128xf32>
    %146 = math.tanh %145 : vector<8x128xf32>
    %c5_i32 = arith.constant 5 : i32
    %147 = arith.truncf %146 : vector<8x128xf32> to vector<8x128xbf16>
    %cst_94 = arith.constant dense<0.000000e+00> : vector<8x128xf32>
    %148 = tpu.matmul %147, %68, %cst_94 {dimension_numbers = #tpu.dot_dimension_numbers<[1], [0], [0], [1], [0, 0, 1, 1], [], []>} : vector<8x128xbf16>, vector<128x128xbf16>, vector<8x128xf32> -> vector<8x128xf32>
    %c8_i32_95 = arith.constant 8 : i32
    %149 = arith.muli %c5_i32, %c8_i32_95 : i32
    %150 = tpu.assume_multiple %149, 8 : i32
    %151 = arith.index_cast %150 : i32 to index
    %c0_96 = arith.constant 0 : index
    %152 = vector.load %arg9[%151, %c0_96] : memref<64x128xf32, #tpu.memory_space<vmem>>, vector<8x128xf32>
    %153 = arith.truncf %141 : vector<8x128xf32> to vector<8x128xbf16>
    %cst_97 = arith.constant dense<0.000000e+00> : vector<8x128xf32>
    %154 = tpu.matmul %153, %66, %cst_97 {dimension_numbers = #tpu.dot_dimension_numbers<[1], [0], [0], [1], [0, 0, 1, 1], [], []>} : vector<8x128xbf16>, vector<128x128xbf16>, vector<8x128xf32> -> vector<8x128xf32>
    %155 = arith.addf %152, %154 : vector<8x128xf32>
    %156 = math.tanh %155 : vector<8x128xf32>
    %157 = arith.truncf %156 : vector<8x128xf32> to vector<8x128xbf16>
    %cst_98 = arith.constant dense<0.000000e+00> : vector<8x128xf32>
    %158 = tpu.matmul %157, %67, %cst_98 {dimension_numbers = #tpu.dot_dimension_numbers<[1], [0], [0], [1], [0, 0, 1, 1], [], []>} : vector<8x128xbf16>, vector<128x128xbf16>, vector<8x128xf32> -> vector<8x128xf32>
    %159 = arith.addf %158, %148 : vector<8x128xf32>
    %160 = arith.addf %159, %69 : vector<8x128xf32>
    %161 = math.tanh %160 : vector<8x128xf32>
    %c6_i32 = arith.constant 6 : i32
    %162 = arith.truncf %161 : vector<8x128xf32> to vector<8x128xbf16>
    %cst_99 = arith.constant dense<0.000000e+00> : vector<8x128xf32>
    %163 = tpu.matmul %162, %68, %cst_99 {dimension_numbers = #tpu.dot_dimension_numbers<[1], [0], [0], [1], [0, 0, 1, 1], [], []>} : vector<8x128xbf16>, vector<128x128xbf16>, vector<8x128xf32> -> vector<8x128xf32>
    %c8_i32_100 = arith.constant 8 : i32
    %164 = arith.muli %c6_i32, %c8_i32_100 : i32
    %165 = tpu.assume_multiple %164, 8 : i32
    %166 = arith.index_cast %165 : i32 to index
    %c0_101 = arith.constant 0 : index
    %167 = vector.load %arg9[%166, %c0_101] : memref<64x128xf32, #tpu.memory_space<vmem>>, vector<8x128xf32>
    %168 = arith.truncf %156 : vector<8x128xf32> to vector<8x128xbf16>
    %cst_102 = arith.constant dense<0.000000e+00> : vector<8x128xf32>
    %169 = tpu.matmul %168, %66, %cst_102 {dimension_numbers = #tpu.dot_dimension_numbers<[1], [0], [0], [1], [0, 0, 1, 1], [], []>} : vector<8x128xbf16>, vector<128x128xbf16>, vector<8x128xf32> -> vector<8x128xf32>
    %170 = arith.addf %167, %169 : vector<8x128xf32>
    %171 = math.tanh %170 : vector<8x128xf32>
    %172 = arith.truncf %171 : vector<8x128xf32> to vector<8x128xbf16>
    %cst_103 = arith.constant dense<0.000000e+00> : vector<8x128xf32>
    %173 = tpu.matmul %172, %67, %cst_103 {dimension_numbers = #tpu.dot_dimension_numbers<[1], [0], [0], [1], [0, 0, 1, 1], [], []>} : vector<8x128xbf16>, vector<128x128xbf16>, vector<8x128xf32> -> vector<8x128xf32>
    %174 = arith.addf %173, %163 : vector<8x128xf32>
    %175 = arith.addf %174, %69 : vector<8x128xf32>
    %176 = math.tanh %175 : vector<8x128xf32>
    %c7_i32 = arith.constant 7 : i32
    %177 = arith.truncf %176 : vector<8x128xf32> to vector<8x128xbf16>
    %cst_104 = arith.constant dense<0.000000e+00> : vector<8x128xf32>
    %178 = tpu.matmul %177, %68, %cst_104 {dimension_numbers = #tpu.dot_dimension_numbers<[1], [0], [0], [1], [0, 0, 1, 1], [], []>} : vector<8x128xbf16>, vector<128x128xbf16>, vector<8x128xf32> -> vector<8x128xf32>
    %c8_i32_105 = arith.constant 8 : i32
    %179 = arith.muli %c7_i32, %c8_i32_105 : i32
    %180 = tpu.assume_multiple %179, 8 : i32
    %181 = arith.index_cast %180 : i32 to index
    %c0_106 = arith.constant 0 : index
    %182 = vector.load %arg9[%181, %c0_106] : memref<64x128xf32, #tpu.memory_space<vmem>>, vector<8x128xf32>
    %183 = arith.truncf %171 : vector<8x128xf32> to vector<8x128xbf16>
    %cst_107 = arith.constant dense<0.000000e+00> : vector<8x128xf32>
    %184 = tpu.matmul %183, %66, %cst_107 {dimension_numbers = #tpu.dot_dimension_numbers<[1], [0], [0], [1], [0, 0, 1, 1], [], []>} : vector<8x128xbf16>, vector<128x128xbf16>, vector<8x128xf32> -> vector<8x128xf32>
    %185 = arith.addf %182, %184 : vector<8x128xf32>
    %186 = math.tanh %185 : vector<8x128xf32>
    %187 = arith.truncf %186 : vector<8x128xf32> to vector<8x128xbf16>
    %cst_108 = arith.constant dense<0.000000e+00> : vector<8x128xf32>
    %188 = tpu.matmul %187, %67, %cst_108 {dimension_numbers = #tpu.dot_dimension_numbers<[1], [0], [0], [1], [0, 0, 1, 1], [], []>} : vector<8x128xbf16>, vector<128x128xbf16>, vector<8x128xf32> -> vector<8x128xf32>
    %189 = arith.addf %188, %178 : vector<8x128xf32>
    %190 = arith.addf %189, %69 : vector<8x128xf32>
    %191 = math.tanh %190 : vector<8x128xf32>
    %c8_i32_109 = arith.constant 8 : i32
    %192 = arith.truncf %191 : vector<8x128xf32> to vector<8x128xbf16>
    %c0_110 = arith.constant 0 : index
    %c0_111 = arith.constant 0 : index
    %193 = vector.load %arg6[%c0_110, %c0_111] : memref<128x128xbf16, #tpu.memory_space<vmem>>, vector<128x128xbf16>
    %cst_112 = arith.constant dense<0.000000e+00> : vector<8x128xf32>
    %194 = tpu.matmul %192, %193, %cst_112 {dimension_numbers = #tpu.dot_dimension_numbers<[1], [0], [0], [1], [0, 0, 1, 1], [], []>} : vector<8x128xbf16>, vector<128x128xbf16>, vector<8x128xf32> -> vector<8x128xf32>
    %c0_113 = arith.constant 0 : index
    %c0_114 = arith.constant 0 : index
    %195 = vector.load %arg7[%c0_113, %c0_114] : memref<8x128xf32, #tpu.memory_space<vmem>>, vector<8x128xf32>
    %196 = arith.addf %194, %195 : vector<8x128xf32>
    %c0_115 = arith.constant 0 : index
    %c0_116 = arith.constant 0 : index
    %197 = vector.load %arg8[%c0_115, %c0_116] : memref<8x128xf32, #tpu.memory_space<vmem>>, vector<8x128xf32>
    tpu.vector_store %arg8[%c0_115, %c0_116], %196 {strides = array<i32>} : memref<8x128xf32, #tpu.memory_space<vmem>>, vector<8x128xf32>,
    return
  }
}

</mosaic_0001>

<llo_original>
// kernel: rnn_model_forward.1
$region0: #{rnn_model_forward.1}
  #allocation0 [shape = 'u32[]', space=smem, size = 0x4, offset = 0x4, fixed_abs, tag = 'smem constant byte address 0x4 - core index']
  #allocation1 [shape = 'u32[144,128]{1,0:T(1,128)}', space=vmem, size = 0x12000, scoped, tag = 'internal scratch']
  #allocation2 [shape = 'f32[64,128]{1,0:T(8,128)}', space=vmem, size = 0x8000, scoped, tag = 'scratch operand']
  %s0 = inlined_call_operand.hbm [shape: s32[2,8], index: 0, kind: input, shape index: {}]
  %s1 = inlined_call_operand.hbm [shape: f32[50,128], index: 1, kind: input, shape index: {}]
  %s2 = inlined_call_operand.hbm [shape: bf16[128,128], index: 2, kind: input, shape index: {}]
  %s3 = inlined_call_operand.hbm [shape: bf16[128,128], index: 3, kind: input, shape index: {}]
  %s4 = inlined_call_operand.hbm [shape: bf16[128,128], index: 4, kind: input, shape index: {}]
  %s5 = inlined_call_operand.hbm [shape: f32[8,128], index: 5, kind: input, shape index: {}]
  %s6 = inlined_call_operand.hbm [shape: bf16[128,128], index: 6, kind: input, shape index: {}]
  %s7 = inlined_call_operand.hbm [shape: f32[8,128], index: 7, kind: input, shape index: {}]
  %s8 = inlined_call_operand.vmem [shape: f32[8,128], index: 8, kind: output, shape index: {}]
  %s9 = sld [smem:[#allocation0]]
  $region74: #{rnn_model_forward.1} parent=0
    _
  %s11 = ssub.s32 1, %s9
  %s12 = scalar_select 0, %s11, %s9
  $region1: #{rnn_model_forward.1} parent=0
    #allocation3 [shape = 'u8[1024]{0}', space=smem, size = 0x400, scoped, tag = 'input window, operand 0, single buffered']
    #allocation4 [shape = 's32[1]{0}', space=sflag, size = 0x4, scoped, tag = 'scoped memory for rnn_model_forward.1']
    #allocation5 [shape = 's32[1]{0}', space=sflag, size = 0x4, scoped, tag = 'scoped memory for rnn_model_forward.1']
    #allocation6 [shape = 'u8[28672]{0}', space=vmem, size = 0x7000, scoped, tag = 'input window, operand 1, single buffered']
    #allocation7 [shape = 'u8[32768]{0}', space=vmem, size = 0x8000, scoped, tag = 'input window, operand 2, single buffered']
    #allocation8 [shape = 's32[1]{0}', space=sflag, size = 0x4, scoped, tag = 'scoped memory for rnn_model_forward.1']
    #allocation9 [shape = 'u8[32768]{0}', space=vmem, size = 0x8000, scoped, tag = 'input window, operand 3, single buffered']
    #allocation10 [shape = 'u8[32768]{0}', space=vmem, size = 0x8000, scoped, tag = 'input window, operand 4, single buffered']
    #allocation11 [shape = 's32[1]{0}', space=sflag, size = 0x4, scoped, tag = 'scoped memory for rnn_model_forward.1']
    #allocation12 [shape = 'u8[4096]{0}', space=vmem, size = 0x1000, scoped, tag = 'input window, operand 5, single buffered']
    #allocation13 [shape = 'u8[32768]{0}', space=vmem, size = 0x8000, scoped, tag = 'input window, operand 6, single buffered']
    #allocation14 [shape = 's32[1]{0}', space=sflag, size = 0x4, scoped, tag = 'scoped memory for rnn_model_forward.1']
    #allocation15 [shape = 'u8[4096]{0}', space=vmem, size = 0x1000, scoped, tag = 'input window, operand 7, single buffered']
    %13 = vsyncpa [#allocation5], 0
    %14 = vsyncpa [#allocation4], 0
    %15 = vsyncpa [#allocation8], 0
    %16 = vsyncpa [#allocation11], 0
    %17 = vsyncpa [#allocation14], 0
    // Predicated region
    $region2: #{rnn_model_forward.1} parent=1 // pred_check
      _
    $region3: #{rnn_model_forward.1} parent=1 // pred_check_branch
      %19 = sbr.rel (0) target = $region5
    $region4: #{rnn_model_forward.1} parent=1 // pred_region
      %s21 = ssub.s32 32, 32
      %22 = vsyncadd [#allocation5], %s21
      %25 = dma.hbm_to_smem %s0, 32, [#allocation3], [#allocation5]
    $region5: #{rnn_model_forward.1} parent=1 // pred_fallthru
      _
    // Predicated region
    $region6: #{rnn_model_forward.1} parent=1 // pred_check
      _
    $region7: #{rnn_model_forward.1} parent=1 // pred_check_branch
      %27 = sbr.rel (0) target = $region9
    $region8: #{rnn_model_forward.1} parent=1 // pred_region
      %s29 = ssub.s32 896, 896
      %30 = vsyncadd [#allocation4], %s29
      %s31 = sshll.u32 [#allocation6], 4
      %s32 = int_to_ptr.vmem [resolvable:$true] %s31
      %37 = dma.hbm_to_vmem [thread:$0]  %s1, 896, %s32, [#allocation4], 128, 128, 8
    $region9: #{rnn_model_forward.1} parent=1 // pred_fallthru
      _
    // Predicated region
    $region10: #{rnn_model_forward.1} parent=1 // pred_check
      _
    $region11: #{rnn_model_forward.1} parent=1 // pred_check_branch
      %39 = sbr.rel (0) target = $region13
    $region12: #{rnn_model_forward.1} parent=1 // pred_region
      %s41 = ssub.s32 1024, 1024
      %42 = vsyncadd [#allocation8], %s41
      %s43 = sshll.u32 [#allocation7], 4
      %s44 = int_to_ptr.vmem [resolvable:$true] %s43
      %49 = dma.hbm_to_vmem [thread:$0]  %s2, 1024, %s44, [#allocation8], 64, 64, 4
    $region13: #{rnn_model_forward.1} parent=1 // pred_fallthru
      _
    // Predicated region
    $region14: #{rnn_model_forward.1} parent=1 // pred_check
      _
    $region15: #{rnn_model_forward.1} parent=1 // pred_check_branch
      %51 = sbr.rel (0) target = $region17
    $region16: #{rnn_model_forward.1} parent=1 // pred_region
      %s53 = ssub.s32 1024, 1024
      %54 = vsyncadd [#allocation8], %s53
      %s55 = sshll.u32 [#allocation9], 4
      %s56 = int_to_ptr.vmem [resolvable:$true] %s55
      %61 = dma.hbm_to_vmem [thread:$0]  %s3, 1024, %s56, [#allocation8], 64, 64, 4
    $region17: #{rnn_model_forward.1} parent=1 // pred_fallthru
      _
    // Predicated region
    $region18: #{rnn_model_forward.1} parent=1 // pred_check
      _
    $region19: #{rnn_model_forward.1} parent=1 // pred_check_branch
      %63 = sbr.rel (0) target = $region21
    $region20: #{rnn_model_forward.1} parent=1 // pred_region
      %s65 = ssub.s32 1024, 1024
      %66 = vsyncadd [#allocation11], %s65
      %s67 = sshll.u32 [#allocation10], 4
      %s68 = int_to_ptr.vmem [resolvable:$true] %s67
      %73 = dma.hbm_to_vmem [thread:$0]  %s4, 1024, %s68, [#allocation11], 64, 64, 4
    $region21: #{rnn_model_forward.1} parent=1 // pred_fallthru
      _
    // Predicated region
    $region22: #{rnn_model_forward.1} parent=1 // pred_check
      _
    $region23: #{rnn_model_forward.1} parent=1 // pred_check_branch
      %75 = sbr.rel (0) target = $region25
    $region24: #{rnn_model_forward.1} parent=1 // pred_region
      %s77 = ssub.s32 128, 128
      %78 = vsyncadd [#allocation11], %s77
      %s80 = sshll.u32 [#allocation12], 4
      %s81 = int_to_ptr.vmem [resolvable:$true] %s80
      %83 = dma.hbm_to_vmem [thread:$0]  %s5, 128, %s81, [#allocation11]
    $region25: #{rnn_model_forward.1} parent=1 // pred_fallthru
      _
    // Predicated region
    $region26: #{rnn_model_forward.1} parent=1 // pred_check
      _
    $region27: #{rnn_model_forward.1} parent=1 // pred_check_branch
      %85 = sbr.rel (0) target = $region29
    $region28: #{rnn_model_forward.1} parent=1 // pred_region
      %s87 = ssub.s32 1024, 1024
      %88 = vsyncadd [#allocation14], %s87
      %s89 = sshll.u32 [#allocation13], 4
      %s90 = int_to_ptr.vmem [resolvable:$true] %s89
      %95 = dma.hbm_to_vmem [thread:$0]  %s6, 1024, %s90, [#allocation14], 64, 64, 4
    $region29: #{rnn_model_forward.1} parent=1 // pred_fallthru
      _
    // Predicated region
    $region30: #{rnn_model_forward.1} parent=1 // pred_check
      _
    $region31: #{rnn_model_forward.1} parent=1 // pred_check_branch
      %97 = sbr.rel (0) target = $region33
    $region32: #{rnn_model_forward.1} parent=1 // pred_region
      %s99 = ssub.s32 128, 128
      %100 = vsyncadd [#allocation14], %s99
      %s102 = sshll.u32 [#allocation15], 4
      %s103 = int_to_ptr.vmem [resolvable:$true] %s102
      %105 = dma.hbm_to_vmem [thread:$0]  %s7, 128, %s103, [#allocation14]
    $region33: #{rnn_model_forward.1} parent=1 // pred_fallthru
      _
    // Predicated region
    $region34: #{rnn_model_forward.1} parent=1 // pred_check
      _
    $region35: #{rnn_model_forward.1} parent=1 // pred_check_branch
      %107 = sbr.rel (0) target = $region37
    $region36: #{rnn_model_forward.1} parent=1 // pred_region
      %108 = dma.done [#allocation5], 32
    $region37: #{rnn_model_forward.1} parent=1 // pred_fallthru
      _
    // Predicated region
    $region38: #{rnn_model_forward.1} parent=1 // pred_check
      _
    $region39: #{rnn_model_forward.1} parent=1 // pred_check_branch
      %110 = sbr.rel (0) target = $region41
    $region40: #{rnn_model_forward.1} parent=1 // pred_region
      %111 = dma.done [#allocation4], 896
    $region41: #{rnn_model_forward.1} parent=1 // pred_fallthru
      _
    // Predicated region
    $region42: #{rnn_model_forward.1} parent=1 // pred_check
      _
    $region43: #{rnn_model_forward.1} parent=1 // pred_check_branch
      %113 = sbr.rel (0) target = $region45
    $region44: #{rnn_model_forward.1} parent=1 // pred_region
      %114 = dma.done [#allocation8], 1024
    $region45: #{rnn_model_forward.1} parent=1 // pred_fallthru
      _
    // Predicated region
    $region46: #{rnn_model_forward.1} parent=1 // pred_check
      _
    $region47: #{rnn_model_forward.1} parent=1 // pred_check_branch
      %116 = sbr.rel (0) target = $region49
    $region48: #{rnn_model_forward.1} parent=1 // pred_region
      %117 = dma.done [#allocation8], 1024
    $region49: #{rnn_model_forward.1} parent=1 // pred_fallthru
      _
    // Predicated region
    $region50: #{rnn_model_forward.1} parent=1 // pred_check
      _
    $region51: #{rnn_model_forward.1} parent=1 // pred_check_branch
      %119 = sbr.rel (0) target = $region53
    $region52: #{rnn_model_forward.1} parent=1 // pred_region
      %120 = dma.done [#allocation11], 1024
    $region53: #{rnn_model_forward.1} parent=1 // pred_fallthru
      _
    // Predicated region
    $region54: #{rnn_model_forward.1} parent=1 // pred_check
      _
    $region55: #{rnn_model_forward.1} parent=1 // pred_check_branch
      %122 = sbr.rel (0) target = $region57
    $region56: #{rnn_model_forward.1} parent=1 // pred_region
      %123 = dma.done [#allocation11], 128
    $region57: #{rnn_model_forward.1} parent=1 // pred_fallthru
      _
    // Predicated region
    $region58: #{rnn_model_forward.1} parent=1 // pred_check
      _
    $region59: #{rnn_model_forward.1} parent=1 // pred_check_branch
      %125 = sbr.rel (0) target = $region61
    $region60: #{rnn_model_forward.1} parent=1 // pred_region
      %126 = dma.done [#allocation14], 1024
    $region61: #{rnn_model_forward.1} parent=1 // pred_fallthru
      _
    // Predicated region
    $region62: #{rnn_model_forward.1} parent=1 // pred_check
      _
    $region63: #{rnn_model_forward.1} parent=1 // pred_check_branch
      %128 = sbr.rel (0) target = $region65
    $region64: #{rnn_model_forward.1} parent=1 // pred_region
      %129 = dma.done [#allocation14], 128
    $region65: #{rnn_model_forward.1} parent=1 // pred_fallthru
      _
    %130 = sfence
    %132 = vst [vmem:[#allocation2] sm:$0xff] 0.0
    %133 = vst [vmem:[#allocation2 + $0x8] sm:$0xff] 0.0
    %134 = vst [vmem:[#allocation2 + $0x10] sm:$0xff] 0.0
    %135 = vst [vmem:[#allocation2 + $0x18] sm:$0xff] 0.0
    %136 = vst [vmem:[#allocation2 + $0x20] sm:$0xff] 0.0
    %137 = vst [vmem:[#allocation2 + $0x28] sm:$0xff] 0.0
    %138 = vst [vmem:[#allocation2 + $0x30] sm:$0xff] 0.0
    %139 = vst [vmem:[#allocation2 + $0x38] sm:$0xff] 0.0
    %s140 = sld [smem:[#allocation3]]
    %s141 = scalar_lea.vmem [#allocation6], %s140
    %v142 = vld [vmem:[%s141] sm:$0x1]
    %143 = vst [vmem:[#allocation2] sm:$0x1] %v142
    %s144 = sld [smem:[#allocation3 + $0x80]]
    %s145 = scalar_lea.vmem [#allocation6], %s144
    %v146 = vld [vmem:[%s145] sm:$0x1]
    %147 = vst [vmem:[#allocation2 + $0x1] sm:$0x1] %v146
    %s148 = sld [smem:[#allocation3 + $0x1]]
    %s149 = scalar_lea.vmem [#allocation6], %s148
    %v150 = vld [vmem:[%s149] sm:$0x1]
    %151 = vst [vmem:[#allocation2 + $0x8] sm:$0x1] %v150
    %s152 = sld [smem:[#allocation3 + $0x81]]
    %s153 = scalar_lea.vmem [#allocation6], %s152
    %v154 = vld [vmem:[%s153] sm:$0x1]
    %155 = vst [vmem:[#allocation2 + $0x9] sm:$0x1] %v154
    %s156 = sld [smem:[#allocation3 + $0x2]]
    %s157 = scalar_lea.vmem [#allocation6], %s156
    %v158 = vld [vmem:[%s157] sm:$0x1]
    %159 = vst [vmem:[#allocation2 + $0x10] sm:$0x1] %v158
    %s160 = sld [smem:[#allocation3 + $0x82]]
    %s161 = scalar_lea.vmem [#allocation6], %s160
    %v162 = vld [vmem:[%s161] sm:$0x1]
    %163 = vst [vmem:[#allocation2 + $0x11] sm:$0x1] %v162
    %s164 = sld [smem:[#allocation3 + $0x3]]
    %s165 = scalar_lea.vmem [#allocation6], %s164
    %v166 = vld [vmem:[%s165] sm:$0x1]
    %167 = vst [vmem:[#allocation2 + $0x18] sm:$0x1] %v166
    %s168 = sld [smem:[#allocation3 + $0x83]]
    %s169 = scalar_lea.vmem [#allocation6], %s168
    %v170 = vld [vmem:[%s169] sm:$0x1]
    %171 = vst [vmem:[#allocation2 + $0x19] sm:$0x1] %v170
    %s172 = sld [smem:[#allocation3 + $0x4]]
    %s173 = scalar_lea.vmem [#allocation6], %s172
    %v174 = vld [vmem:[%s173] sm:$0x1]
    %175 = vst [vmem:[#allocation2 + $0x20] sm:$0x1] %v174
    %s176 = sld [smem:[#allocation3 + $0x84]]
    %s177 = scalar_lea.vmem [#allocation6], %s176
    %v178 = vld [vmem:[%s177] sm:$0x1]
    %179 = vst [vmem:[#allocation2 + $0x21] sm:$0x1] %v178
    %s180 = sld [smem:[#allocation3 + $0x5]]
    %s181 = scalar_lea.vmem [#allocation6], %s180
    %v182 = vld [vmem:[%s181] sm:$0x1]
    %183 = vst [vmem:[#allocation2 + $0x28] sm:$0x1] %v182
    %s184 = sld [smem:[#allocation3 + $0x85]]
    %s185 = scalar_lea.vmem [#allocation6], %s184
    %v186 = vld [vmem:[%s185] sm:$0x1]
    %187 = vst [vmem:[#allocation2 + $0x29] sm:$0x1] %v186
    %s188 = sld [smem:[#allocation3 + $0x6]]
    %s189 = scalar_lea.vmem [#allocation6], %s188
    %v190 = vld [vmem:[%s189] sm:$0x1]
    %191 = vst [vmem:[#allocation2 + $0x30] sm:$0x1] %v190
    %s192 = sld [smem:[#allocation3 + $0x86]]
    %s193 = scalar_lea.vmem [#allocation6], %s192
    %v194 = vld [vmem:[%s193] sm:$0x1]
    %195 = vst [vmem:[#allocation2 + $0x31] sm:$0x1] %v194
    %s196 = sld [smem:[#allocation3 + $0x7]]
    %s197 = scalar_lea.vmem [#allocation6], %s196
    %v198 = vld [vmem:[%s197] sm:$0x1]
    %199 = vst [vmem:[#allocation2 + $0x38] sm:$0x1] %v198
    %s200 = sld [smem:[#allocation3 + $0x87]]
    %s201 = scalar_lea.vmem [#allocation6], %s200
    %v202 = vld [vmem:[%s201] sm:$0x1]
    %203 = vst [vmem:[#allocation2 + $0x39] sm:$0x1] %v202
    %v204 = vld [vmem:[#allocation7] sm:$0xf]
    %v205 = vld [vmem:[#allocation7 + $0x4] sm:$0xf]
    %v206 = vld [vmem:[#allocation7 + $0x8] sm:$0xf]
    %v207 = vld [vmem:[#allocation7 + $0xc] sm:$0xf]
    %v208 = vld [vmem:[#allocation7 + $0x10] sm:$0xf]
    %v209 = vld [vmem:[#allocation7 + $0x14] sm:$0xf]
    %v210 = vld [vmem:[#allocation7 + $0x18] sm:$0xf]
    %v211 = vld [vmem:[#allocation7 + $0x1c] sm:$0xf]
    %v212 = vld [vmem:[#allocation7 + $0x20] sm:$0xf]
    %v213 = vld [vmem:[#allocation7 + $0x24] sm:$0xf]
    %v214 = vld [vmem:[#allocation7 + $0x28] sm:$0xf]
    %v215 = vld [vmem:[#allocation7 + $0x2c] sm:$0xf]
    %v216 = vld [vmem:[#allocation7 + $0x30] sm:$0xf]
    %v217 = vld [vmem:[#allocation7 + $0x34] sm:$0xf]
    %v218 = vld [vmem:[#allocation7 + $0x38] sm:$0xf]
    %v219 = vld [vmem:[#allocation7 + $0x3c] sm:$0xf]
    %v220 = vld [vmem:[#allocation9] sm:$0xf]
    %v221 = vld [vmem:[#allocation9 + $0x4] sm:$0xf]
    %v222 = vld [vmem:[#allocation9 + $0x8] sm:$0xf]
    %v223 = vld [vmem:[#allocation9 + $0xc] sm:$0xf]
    %v224 = vld [vmem:[#allocation9 + $0x10] sm:$0xf]
    %v225 = vld [vmem:[#allocation9 + $0x14] sm:$0xf]
    %v226 = vld [vmem:[#allocation9 + $0x18] sm:$0xf]
    %v227 = vld [vmem:[#allocation9 + $0x1c] sm:$0xf]
    %v228 = vld [vmem:[#allocation9 + $0x20] sm:$0xf]
    %v229 = vld [vmem:[#allocation9 + $0x24] sm:$0xf]
    %v230 = vld [vmem:[#allocation9 + $0x28] sm:$0xf]
    %v231 = vld [vmem:[#allocation9 + $0x2c] sm:$0xf]
    %v232 = vld [vmem:[#allocation9 + $0x30] sm:$0xf]
    %v233 = vld [vmem:[#allocation9 + $0x34] sm:$0xf]
    %v234 = vld [vmem:[#allocation9 + $0x38] sm:$0xf]
    %v235 = vld [vmem:[#allocation9 + $0x3c] sm:$0xf]
    %v236 = vld [vmem:[#allocation10] sm:$0xf]
    %v237 = vld [vmem:[#allocation10 + $0x4] sm:$0xf]
    %v238 = vld [vmem:[#allocation10 + $0x8] sm:$0xf]
    %v239 = vld [vmem:[#allocation10 + $0xc] sm:$0xf]
    %v240 = vld [vmem:[#allocation10 + $0x10] sm:$0xf]
    %v241 = vld [vmem:[#allocation10 + $0x14] sm:$0xf]
    %v242 = vld [vmem:[#allocation10 + $0x18] sm:$0xf]
    %v243 = vld [vmem:[#allocation10 + $0x1c] sm:$0xf]
    %v244 = vld [vmem:[#allocation10 + $0x20] sm:$0xf]
    %v245 = vld [vmem:[#allocation10 + $0x24] sm:$0xf]
    %v246 = vld [vmem:[#allocation10 + $0x28] sm:$0xf]
    %v247 = vld [vmem:[#allocation10 + $0x2c] sm:$0xf]
    %v248 = vld [vmem:[#allocation10 + $0x30] sm:$0xf]
    %v249 = vld [vmem:[#allocation10 + $0x34] sm:$0xf]
    %v250 = vld [vmem:[#allocation10 + $0x38] sm:$0xf]
    %v251 = vld [vmem:[#allocation10 + $0x3c] sm:$0xf]
    %v252 = vld [vmem:[#allocation12] sm:$0xff]
    %v269 = vunpack.c.l.b16 %v236
    %v270 = vunpack.c.l.b16 %v237
    %v271 = vunpack.c.l.b16 %v238
    %v272 = vunpack.c.l.b16 %v239
    %v273 = vunpack.c.l.b16 %v240
    %v274 = vunpack.c.l.b16 %v241
    %v275 = vunpack.c.l.b16 %v242
    %v276 = vunpack.c.l.b16 %v243
    %v277 = vunpack.c.l.b16 %v244
    %v278 = vunpack.c.l.b16 %v245
    %v279 = vunpack.c.l.b16 %v246
    %v280 = vunpack.c.l.b16 %v247
    %v281 = vunpack.c.l.b16 %v248
    %v282 = vunpack.c.l.b16 %v249
    %v283 = vunpack.c.l.b16 %v250
    %v284 = vunpack.c.l.b16 %v251
    %v285 = vpack.c.b16 %v270, %v269
    %v286 = vpack.c.b16 %v272, %v271
    %v287 = vpack.c.b16 %v274, %v273
    %v288 = vpack.c.b16 %v276, %v275
    %v289 = vpack.c.b16 %v278, %v277
    %v290 = vpack.c.b16 %v280, %v279
    %v291 = vpack.c.b16 %v282, %v281
    %v292 = vpack.c.b16 %v284, %v283
    %301 = vmatprep.subr.bf16.mxu0 0
    %302 = vmatpush1.bf16.msra.mxu0 %v285
    %303 = vmatprep.subr.bf16.mxu0 0
    %304 = vmatpush1.bf16.msra.mxu0 %v286
    %305 = vmatprep.subr.bf16.mxu0 0
    %306 = vmatpush1.bf16.msra.mxu0 %v287
    %307 = vmatprep.subr.bf16.mxu0 0
    %308 = vmatpush1.bf16.msra.mxu0 %v288
    %309 = vmatprep.subr.bf16.mxu0 0
    %310 = vmatpush1.bf16.msra.mxu0 %v289
    %311 = vmatprep.subr.bf16.mxu0 0
    %312 = vmatpush1.bf16.msra.mxu0 %v290
    %313 = vmatprep.subr.bf16.mxu0 0
    %314 = vmatpush1.bf16.msra.mxu0 %v291
    %315 = vmatprep.subr.bf16.mxu0 0
    %316 = vmatpush1.bf16.msra.mxu0 %v292
    %317 = vmatprep.subr.bf16.mxu0 0
    %318 = vmatpush1.bf16.msra.mxu0 0
    %319 = vmatprep.subr.bf16.mxu0 0
    %320 = vmatpush1.bf16.msra.mxu0 0
    %321 = vmatprep.subr.bf16.mxu0 0
    %322 = vmatpush1.bf16.msra.mxu0 0
    %323 = vmatprep.subr.bf16.mxu0 0
    %324 = vmatpush1.bf16.msra.mxu0 0
    %325 = vmatprep.subr.bf16.mxu0 0
    %326 = vmatpush1.bf16.msra.mxu0 0
    %327 = vmatprep.subr.bf16.mxu0 0
    %328 = vmatpush1.bf16.msra.mxu0 0
    %329 = vmatprep.subr.bf16.mxu0 0
    %330 = vmatpush1.bf16.msra.mxu0 0
    %331 = vmatprep.subr.bf16.mxu0 0
    %332 = vmatpush1.bf16.msra.mxu0 0
    %333 = vmatprep.mubr.bf16.mxu0 0
    %334 = vmatmul.mubr.bf16.gmra.mrb[0].mxu0 0
    %v335 = vpop.f32.mrb[0].mxu0
    %v336 = vadd.f32 0.0, %v335
    %v337 = vpop.f32.mrb[0].mxu0
    %v338 = vpop.f32.mrb[0].mxu0
    %v339 = vpop.f32.mrb[0].mxu0
    %340 = vdwg.mxu0
    %v341 = vld [vmem:[#allocation2] sm:$0xff]
    %v358 = vunpack.c.l.b16 %v204
    %v359 = vunpack.c.l.b16 %v205
    %v360 = vunpack.c.l.b16 %v206
    %v361 = vunpack.c.l.b16 %v207
    %v362 = vunpack.c.l.b16 %v208
    %v363 = vunpack.c.l.b16 %v209
    %v364 = vunpack.c.l.b16 %v210
    %v365 = vunpack.c.l.b16 %v211
    %v366 = vunpack.c.l.b16 %v212
    %v367 = vunpack.c.l.b16 %v213
    %v368 = vunpack.c.l.b16 %v214
    %v369 = vunpack.c.l.b16 %v215
    %v370 = vunpack.c.l.b16 %v216
    %v371 = vunpack.c.l.b16 %v217
    %v372 = vunpack.c.l.b16 %v218
    %v373 = vunpack.c.l.b16 %v219
    %v374 = vpack.c.b16 %v359, %v358
    %v375 = vpack.c.b16 %v361, %v360
    %v376 = vpack.c.b16 %v363, %v362
    %v377 = vpack.c.b16 %v365, %v364
    %v378 = vpack.c.b16 %v367, %v366
    %v379 = vpack.c.b16 %v369, %v368
    %v380 = vpack.c.b16 %v371, %v370
    %v381 = vpack.c.b16 %v373, %v372
    %390 = vmatprep.subr.bf16.mxu0 0
    %391 = vmatpush1.bf16.msra.mxu0 %v374
    %392 = vmatprep.subr.bf16.mxu0 0
    %393 = vmatpush1.bf16.msra.mxu0 %v375
    %394 = vmatprep.subr.bf16.mxu0 0
    %395 = vmatpush1.bf16.msra.mxu0 %v376
    %396 = vmatprep.subr.bf16.mxu0 0
    %397 = vmatpush1.bf16.msra.mxu0 %v377
    %398 = vmatprep.subr.bf16.mxu0 0
    %399 = vmatpush1.bf16.msra.mxu0 %v378
    %400 = vmatprep.subr.bf16.mxu0 0
    %401 = vmatpush1.bf16.msra.mxu0 %v379
    %402 = vmatprep.subr.bf16.mxu0 0
    %403 = vmatpush1.bf16.msra.mxu0 %v380
    %404 = vmatprep.subr.bf16.mxu0 0
    %405 = vmatpush1.bf16.msra.mxu0 %v381
    %406 = vmatprep.subr.bf16.mxu0 0
    %407 = vmatpush1.bf16.msra.mxu0 0
    %408 = vmatprep.subr.bf16.mxu0 0
    %409 = vmatpush1.bf16.msra.mxu0 0
    %410 = vmatprep.subr.bf16.mxu0 0
    %411 = vmatpush1.bf16.msra.mxu0 0
    %412 = vmatprep.subr.bf16.mxu0 0
    %413 = vmatpush1.bf16.msra.mxu0 0
    %414 = vmatprep.subr.bf16.mxu0 0
    %415 = vmatpush1.bf16.msra.mxu0 0
    %416 = vmatprep.subr.bf16.mxu0 0
    %417 = vmatpush1.bf16.msra.mxu0 0
    %418 = vmatprep.subr.bf16.mxu0 0
    %419 = vmatpush1.bf16.msra.mxu0 0
    %420 = vmatprep.subr.bf16.mxu0 0
    %421 = vmatpush1.bf16.msra.mxu0 0
    %422 = vmatprep.mubr.bf16.mxu0 0
    %423 = vmatmul.mubr.bf16.gmra.mrb[0].mxu0 0
    %v424 = vpop.f32.mrb[0].mxu0
    %v425 = vadd.f32 0.0, %v424
    %v426 = vpop.f32.mrb[0].mxu0
    %v427 = vpop.f32.mrb[0].mxu0
    %v428 = vpop.f32.mrb[0].mxu0
    %429 = vdwg.mxu0
    %v430 = vadd.f32 %v341, %v425
    %v431 = vtanh.pop %v430
    %v432 = vpack.c.bf16 %v431, %v431
    %v449 = vunpack.c.l.b16 %v220
    %v450 = vunpack.c.l.b16 %v221
    %v451 = vunpack.c.l.b16 %v222
    %v452 = vunpack.c.l.b16 %v223
    %v453 = vunpack.c.l.b16 %v224
    %v454 = vunpack.c.l.b16 %v225
    %v455 = vunpack.c.l.b16 %v226
    %v456 = vunpack.c.l.b16 %v227
    %v457 = vunpack.c.l.b16 %v228
    %v458 = vunpack.c.l.b16 %v229
    %v459 = vunpack.c.l.b16 %v230
    %v460 = vunpack.c.l.b16 %v231
    %v461 = vunpack.c.l.b16 %v232
    %v462 = vunpack.c.l.b16 %v233
    %v463 = vunpack.c.l.b16 %v234
    %v464 = vunpack.c.l.b16 %v235
    %v465 = vpack.c.b16 %v450, %v449
    %v466 = vpack.c.b16 %v452, %v451
    %v467 = vpack.c.b16 %v454, %v453
    %v468 = vpack.c.b16 %v456, %v455
    %v469 = vpack.c.b16 %v458, %v457
    %v470 = vpack.c.b16 %v460, %v459
    %v471 = vpack.c.b16 %v462, %v461
    %v472 = vpack.c.b16 %v464, %v463
    %481 = vmatprep.subr.bf16.mxu0 0
    %482 = vmatpush1.bf16.msra.mxu0 %v465
    %483 = vmatprep.subr.bf16.mxu0 0
    %484 = vmatpush1.bf16.msra.mxu0 %v466
    %485 = vmatprep.subr.bf16.mxu0 0
    %486 = vmatpush1.bf16.msra.mxu0 %v467
    %487 = vmatprep.subr.bf16.mxu0 0
    %488 = vmatpush1.bf16.msra.mxu0 %v468
    %489 = vmatprep.subr.bf16.mxu0 0
    %490 = vmatpush1.bf16.msra.mxu0 %v469
    %491 = vmatprep.subr.bf16.mxu0 0
    %492 = vmatpush1.bf16.msra.mxu0 %v470
    %493 = vmatprep.subr.bf16.mxu0 0
    %494 = vmatpush1.bf16.msra.mxu0 %v471
    %495 = vmatprep.subr.bf16.mxu0 0
    %496 = vmatpush1.bf16.msra.mxu0 %v472
    %497 = vmatprep.subr.bf16.mxu0 0
    %498 = vmatpush1.bf16.msra.mxu0 0
    %499 = vmatprep.subr.bf16.mxu0 0
    %500 = vmatpush1.bf16.msra.mxu0 0
    %501 = vmatprep.subr.bf16.mxu0 0
    %502 = vmatpush1.bf16.msra.mxu0 0
    %503 = vmatprep.subr.bf16.mxu0 0
    %504 = vmatpush1.bf16.msra.mxu0 0
    %505 = vmatprep.subr.bf16.mxu0 0
    %506 = vmatpush1.bf16.msra.mxu0 0
    %507 = vmatprep.subr.bf16.mxu0 0
    %508 = vmatpush1.bf16.msra.mxu0 0
    %509 = vmatprep.subr.bf16.mxu0 0
    %510 = vmatpush1.bf16.msra.mxu0 0
    %511 = vmatprep.subr.bf16.mxu0 0
    %512 = vmatpush1.bf16.msra.mxu0 0
    %513 = vmatprep.mubr.bf16.mxu0 0
    %514 = vmatmul.mubr.bf16.gmra.mrb[0].mxu0 %v432
    %v515 = vpop.f32.mrb[0].mxu0
    %v516 = vadd.f32 %v336, %v515
    %v517 = vpop.f32.mrb[0].mxu0
    %v518 = vpop.f32.mrb[0].mxu0
    %v519 = vpop.f32.mrb[0].mxu0
    %520 = vdwg.mxu0
    %v521 = vadd.f32 %v516, %v252
    %v522 = vtanh.pop %v521
    %v523 = vpack.c.bf16 %v522, %v522
    %524 = vmatprep.subr.bf16.mxu0 0
    %525 = vmatpush1.bf16.msra.mxu0 %v285
    %526 = vmatprep.subr.bf16.mxu0 0
    %527 = vmatpush1.bf16.msra.mxu0 %v286
    %528 = vmatprep.subr.bf16.mxu0 0
    %529 = vmatpush1.bf16.msra.mxu0 %v287
    %530 = vmatprep.subr.bf16.mxu0 0
    %531 = vmatpush1.bf16.msra.mxu0 %v288
    %532 = vmatprep.subr.bf16.mxu0 0
    %533 = vmatpush1.bf16.msra.mxu0 %v289
    %534 = vmatprep.subr.bf16.mxu0 0
    %535 = vmatpush1.bf16.msra.mxu0 %v290
    %536 = vmatprep.subr.bf16.mxu0 0
    %537 = vmatpush1.bf16.msra.mxu0 %v291
    %538 = vmatprep.subr.bf16.mxu0 0
    %539 = vmatpush1.bf16.msra.mxu0 %v292
    %540 = vmatprep.subr.bf16.mxu0 0
    %541 = vmatpush1.bf16.msra.mxu0 0
    %542 = vmatprep.subr.bf16.mxu0 0
    %543 = vmatpush1.bf16.msra.mxu0 0
    %544 = vmatprep.subr.bf16.mxu0 0
    %545 = vmatpush1.bf16.msra.mxu0 0
    %546 = vmatprep.subr.bf16.mxu0 0
    %547 = vmatpush1.bf16.msra.mxu0 0
    %548 = vmatprep.subr.bf16.mxu0 0
    %549 = vmatpush1.bf16.msra.mxu0 0
    %550 = vmatprep.subr.bf16.mxu0 0
    %551 = vmatpush1.bf16.msra.mxu0 0
    %552 = vmatprep.subr.bf16.mxu0 0
    %553 = vmatpush1.bf16.msra.mxu0 0
    %554 = vmatprep.subr.bf16.mxu0 0
    %555 = vmatpush1.bf16.msra.mxu0 0
    %556 = vmatprep.mubr.bf16.mxu0 0
    %557 = vmatmul.mubr.bf16.gmra.mrb[0].mxu0 %v523
    %v558 = vpop.f32.mrb[0].mxu0
    %v559 = vadd.f32 0.0, %v558
    %v560 = vpop.f32.mrb[0].mxu0
    %v561 = vpop.f32.mrb[0].mxu0
    %v562 = vpop.f32.mrb[0].mxu0
    %563 = vdwg.mxu0
    %s564 = scalar_lea.vmem [#allocation2], 8
    %v565 = vld [vmem:[%s564] sm:$0xff]
    %566 = vmatprep.subr.bf16.mxu0 0
    %567 = vmatpush1.bf16.msra.mxu0 %v374
    %568 = vmatprep.subr.bf16.mxu0 0
    %569 = vmatpush1.bf16.msra.mxu0 %v375
    %570 = vmatprep.subr.bf16.mxu0 0
    %571 = vmatpush1.bf16.msra.mxu0 %v376
    %572 = vmatprep.subr.bf16.mxu0 0
    %573 = vmatpush1.bf16.msra.mxu0 %v377
    %574 = vmatprep.subr.bf16.mxu0 0
    %575 = vmatpush1.bf16.msra.mxu0 %v378
    %576 = vmatprep.subr.bf16.mxu0 0
    %577 = vmatpush1.bf16.msra.mxu0 %v379
    %578 = vmatprep.subr.bf16.mxu0 0
    %579 = vmatpush1.bf16.msra.mxu0 %v380
    %580 = vmatprep.subr.bf16.mxu0 0
    %581 = vmatpush1.bf16.msra.mxu0 %v381
    %582 = vmatprep.subr.bf16.mxu0 0
    %583 = vmatpush1.bf16.msra.mxu0 0
    %584 = vmatprep.subr.bf16.mxu0 0
    %585 = vmatpush1.bf16.msra.mxu0 0
    %586 = vmatprep.subr.bf16.mxu0 0
    %587 = vmatpush1.bf16.msra.mxu0 0
    %588 = vmatprep.subr.bf16.mxu0 0
    %589 = vmatpush1.bf16.msra.mxu0 0
    %590 = vmatprep.subr.bf16.mxu0 0
    %591 = vmatpush1.bf16.msra.mxu0 0
    %592 = vmatprep.subr.bf16.mxu0 0
    %593 = vmatpush1.bf16.msra.mxu0 0
    %594 = vmatprep.subr.bf16.mxu0 0
    %595 = vmatpush1.bf16.msra.mxu0 0
    %596 = vmatprep.subr.bf16.mxu0 0
    %597 = vmatpush1.bf16.msra.mxu0 0
    %598 = vmatprep.mubr.bf16.mxu0 0
    %599 = vmatmul.mubr.bf16.gmra.mrb[0].mxu0 %v432
    %v600 = vpop.f32.mrb[0].mxu0
    %v601 = vadd.f32 0.0, %v600
    %v602 = vpop.f32.mrb[0].mxu0
    %v603 = vpop.f32.mrb[0].mxu0
    %v604 = vpop.f32.mrb[0].mxu0
    %605 = vdwg.mxu0
    %v606 = vadd.f32 %v565, %v601
    %v607 = vtanh.pop %v606
    %v608 = vpack.c.bf16 %v607, %v607
    %609 = vmatprep.subr.bf16.mxu0 0
    %610 = vmatpush1.bf16.msra.mxu0 %v465
    %611 = vmatprep.subr.bf16.mxu0 0
    %612 = vmatpush1.bf16.msra.mxu0 %v466
    %613 = vmatprep.subr.bf16.mxu0 0
    %614 = vmatpush1.bf16.msra.mxu0 %v467
    %615 = vmatprep.subr.bf16.mxu0 0
    %616 = vmatpush1.bf16.msra.mxu0 %v468
    %617 = vmatprep.subr.bf16.mxu0 0
    %618 = vmatpush1.bf16.msra.mxu0 %v469
    %619 = vmatprep.subr.bf16.mxu0 0
    %620 = vmatpush1.bf16.msra.mxu0 %v470
    %621 = vmatprep.subr.bf16.mxu0 0
    %622 = vmatpush1.bf16.msra.mxu0 %v471
    %623 = vmatprep.subr.bf16.mxu0 0
    %624 = vmatpush1.bf16.msra.mxu0 %v472
    %625 = vmatprep.subr.bf16.mxu0 0
    %626 = vmatpush1.bf16.msra.mxu0 0
    %627 = vmatprep.subr.bf16.mxu0 0
    %628 = vmatpush1.bf16.msra.mxu0 0
    %629 = vmatprep.subr.bf16.mxu0 0
    %630 = vmatpush1.bf16.msra.mxu0 0
    %631 = vmatprep.subr.bf16.mxu0 0
    %632 = vmatpush1.bf16.msra.mxu0 0
    %633 = vmatprep.subr.bf16.mxu0 0
    %634 = vmatpush1.bf16.msra.mxu0 0
    %635 = vmatprep.subr.bf16.mxu0 0
    %636 = vmatpush1.bf16.msra.mxu0 0
    %637 = vmatprep.subr.bf16.mxu0 0
    %638 = vmatpush1.bf16.msra.mxu0 0
    %639 = vmatprep.subr.bf16.mxu0 0
    %640 = vmatpush1.bf16.msra.mxu0 0
    %641 = vmatprep.mubr.bf16.mxu0 0
    %642 = vmatmul.mubr.bf16.gmra.mrb[0].mxu0 %v608
    %v643 = vpop.f32.mrb[0].mxu0
    %v644 = vadd.f32 %v559, %v643
    %v645 = vpop.f32.mrb[0].mxu0
    %v646 = vpop.f32.mrb[0].mxu0
    %v647 = vpop.f32.mrb[0].mxu0
    %648 = vdwg.mxu0
    %v649 = vadd.f32 %v644, %v252
    %v650 = vtanh.pop %v649
    %v651 = vpack.c.bf16 %v650, %v650
    %652 = vmatprep.subr.bf16.mxu0 0
    %653 = vmatpush1.bf16.msra.mxu0 %v285
    %654 = vmatprep.subr.bf16.mxu0 0
    %655 = vmatpush1.bf16.msra.mxu0 %v286
    %656 = vmatprep.subr.bf16.mxu0 0
    %657 = vmatpush1.bf16.msra.mxu0 %v287
    %658 = vmatprep.subr.bf16.mxu0 0
    %659 = vmatpush1.bf16.msra.mxu0 %v288
    %660 = vmatprep.subr.bf16.mxu0 0
    %661 = vmatpush1.bf16.msra.mxu0 %v289
    %662 = vmatprep.subr.bf16.mxu0 0
    %663 = vmatpush1.bf16.msra.mxu0 %v290
    %664 = vmatprep.subr.bf16.mxu0 0
    %665 = vmatpush1.bf16.msra.mxu0 %v291
    %666 = vmatprep.subr.bf16.mxu0 0
    %667 = vmatpush1.bf16.msra.mxu0 %v292
    %668 = vmatprep.subr.bf16.mxu0 0
    %669 = vmatpush1.bf16.msra.mxu0 0
    %670 = vmatprep.subr.bf16.mxu0 0
    %671 = vmatpush1.bf16.msra.mxu0 0
    %672 = vmatprep.subr.bf16.mxu0 0
    %673 = vmatpush1.bf16.msra.mxu0 0
    %674 = vmatprep.subr.bf16.mxu0 0
    %675 = vmatpush1.bf16.msra.mxu0 0
    %676 = vmatprep.subr.bf16.mxu0 0
    %677 = vmatpush1.bf16.msra.mxu0 0
    %678 = vmatprep.subr.bf16.mxu0 0
    %679 = vmatpush1.bf16.msra.mxu0 0
    %680 = vmatprep.subr.bf16.mxu0 0
    %681 = vmatpush1.bf16.msra.mxu0 0
    %682 = vmatprep.subr.bf16.mxu0 0
    %683 = vmatpush1.bf16.msra.mxu0 0
    %684 = vmatprep.mubr.bf16.mxu0 0
    %685 = vmatmul.mubr.bf16.gmra.mrb[0].mxu0 %v651
    %v686 = vpop.f32.mrb[0].mxu0
    %v687 = vadd.f32 0.0, %v686
    %v688 = vpop.f32.mrb[0].mxu0
    %v689 = vpop.f32.mrb[0].mxu0
    %v690 = vpop.f32.mrb[0].mxu0
    %691 = vdwg.mxu0
    %s692 = scalar_lea.vmem [#allocation2], 16
    %v693 = vld [vmem:[%s692] sm:$0xff]
    %694 = vmatprep.subr.bf16.mxu0 0
    %695 = vmatpush1.bf16.msra.mxu0 %v374
    %696 = vmatprep.subr.bf16.mxu0 0
    %697 = vmatpush1.bf16.msra.mxu0 %v375
    %698 = vmatprep.subr.bf16.mxu0 0
    %699 = vmatpush1.bf16.msra.mxu0 %v376
    %700 = vmatprep.subr.bf16.mxu0 0
    %701 = vmatpush1.bf16.msra.mxu0 %v377
    %702 = vmatprep.subr.bf16.mxu0 0
    %703 = vmatpush1.bf16.msra.mxu0 %v378
    %704 = vmatprep.subr.bf16.mxu0 0
    %705 = vmatpush1.bf16.msra.mxu0 %v379
    %706 = vmatprep.subr.bf16.mxu0 0
    %707 = vmatpush1.bf16.msra.mxu0 %v380
    %708 = vmatprep.subr.bf16.mxu0 0
    %709 = vmatpush1.bf16.msra.mxu0 %v381
    %710 = vmatprep.subr.bf16.mxu0 0
    %711 = vmatpush1.bf16.msra.mxu0 0
    %712 = vmatprep.subr.bf16.mxu0 0
    %713 = vmatpush1.bf16.msra.mxu0 0
    %714 = vmatprep.subr.bf16.mxu0 0
    %715 = vmatpush1.bf16.msra.mxu0 0
    %716 = vmatprep.subr.bf16.mxu0 0
    %717 = vmatpush1.bf16.msra.mxu0 0
    %718 = vmatprep.subr.bf16.mxu0 0
    %719 = vmatpush1.bf16.msra.mxu0 0
    %720 = vmatprep.subr.bf16.mxu0 0
    %721 = vmatpush1.bf16.msra.mxu0 0
    %722 = vmatprep.subr.bf16.mxu0 0
    %723 = vmatpush1.bf16.msra.mxu0 0
    %724 = vmatprep.subr.bf16.mxu0 0
    %725 = vmatpush1.bf16.msra.mxu0 0
    %726 = vmatprep.mubr.bf16.mxu0 0
    %727 = vmatmul.mubr.bf16.gmra.mrb[0].mxu0 %v608
    %v728 = vpop.f32.mrb[0].mxu0
    %v729 = vadd.f32 0.0, %v728
    %v730 = vpop.f32.mrb[0].mxu0
    %v731 = vpop.f32.mrb[0].mxu0
    %v732 = vpop.f32.mrb[0].mxu0
    %733 = vdwg.mxu0
    %v734 = vadd.f32 %v693, %v729
    %v735 = vtanh.pop %v734
    %v736 = vpack.c.bf16 %v735, %v735
    %737 = vmatprep.subr.bf16.mxu0 0
    %738 = vmatpush1.bf16.msra.mxu0 %v465
    %739 = vmatprep.subr.bf16.mxu0 0
    %740 = vmatpush1.bf16.msra.mxu0 %v466
    %741 = vmatprep.subr.bf16.mxu0 0
    %742 = vmatpush1.bf16.msra.mxu0 %v467
    %743 = vmatprep.subr.bf16.mxu0 0
    %744 = vmatpush1.bf16.msra.mxu0 %v468
    %745 = vmatprep.subr.bf16.mxu0 0
    %746 = vmatpush1.bf16.msra.mxu0 %v469
    %747 = vmatprep.subr.bf16.mxu0 0
    %748 = vmatpush1.bf16.msra.mxu0 %v470
    %749 = vmatprep.subr.bf16.mxu0 0
    %750 = vmatpush1.bf16.msra.mxu0 %v471
    %751 = vmatprep.subr.bf16.mxu0 0
    %752 = vmatpush1.bf16.msra.mxu0 %v472
    %753 = vmatprep.subr.bf16.mxu0 0
    %754 = vmatpush1.bf16.msra.mxu0 0
    %755 = vmatprep.subr.bf16.mxu0 0
    %756 = vmatpush1.bf16.msra.mxu0 0
    %757 = vmatprep.subr.bf16.mxu0 0
    %758 = vmatpush1.bf16.msra.mxu0 0
    %759 = vmatprep.subr.bf16.mxu0 0
    %760 = vmatpush1.bf16.msra.mxu0 0
    %761 = vmatprep.subr.bf16.mxu0 0
    %762 = vmatpush1.bf16.msra.mxu0 0
    %763 = vmatprep.subr.bf16.mxu0 0
    %764 = vmatpush1.bf16.msra.mxu0 0
    %765 = vmatprep.subr.bf16.mxu0 0
    %766 = vmatpush1.bf16.msra.mxu0 0
    %767 = vmatprep.subr.bf16.mxu0 0
    %768 = vmatpush1.bf16.msra.mxu0 0
    %769 = vmatprep.mubr.bf16.mxu0 0
    %770 = vmatmul.mubr.bf16.gmra.mrb[0].mxu0 %v736
    %v771 = vpop.f32.mrb[0].mxu0
    %v772 = vadd.f32 %v687, %v771
    %v773 = vpop.f32.mrb[0].mxu0
    %v774 = vpop.f32.mrb[0].mxu0
    %v775 = vpop.f32.mrb[0].mxu0
    %776 = vdwg.mxu0
    %v777 = vadd.f32 %v772, %v252
    %v778 = vtanh.pop %v777
    %v779 = vpack.c.bf16 %v778, %v778
    %780 = vmatprep.subr.bf16.mxu0 0
    %781 = vmatpush1.bf16.msra.mxu0 %v285
    %782 = vmatprep.subr.bf16.mxu0 0
    %783 = vmatpush1.bf16.msra.mxu0 %v286
    %784 = vmatprep.subr.bf16.mxu0 0
    %785 = vmatpush1.bf16.msra.mxu0 %v287
    %786 = vmatprep.subr.bf16.mxu0 0
    %787 = vmatpush1.bf16.msra.mxu0 %v288
    %788 = vmatprep.subr.bf16.mxu0 0
    %789 = vmatpush1.bf16.msra.mxu0 %v289
    %790 = vmatprep.subr.bf16.mxu0 0
    %791 = vmatpush1.bf16.msra.mxu0 %v290
    %792 = vmatprep.subr.bf16.mxu0 0
    %793 = vmatpush1.bf16.msra.mxu0 %v291
    %794 = vmatprep.subr.bf16.mxu0 0
    %795 = vmatpush1.bf16.msra.mxu0 %v292
    %796 = vmatprep.subr.bf16.mxu0 0
    %797 = vmatpush1.bf16.msra.mxu0 0
    %798 = vmatprep.subr.bf16.mxu0 0
    %799 = vmatpush1.bf16.msra.mxu0 0
    %800 = vmatprep.subr.bf16.mxu0 0
    %801 = vmatpush1.bf16.msra.mxu0 0
    %802 = vmatprep.subr.bf16.mxu0 0
    %803 = vmatpush1.bf16.msra.mxu0 0
    %804 = vmatprep.subr.bf16.mxu0 0
    %805 = vmatpush1.bf16.msra.mxu0 0
    %806 = vmatprep.subr.bf16.mxu0 0
    %807 = vmatpush1.bf16.msra.mxu0 0
    %808 = vmatprep.subr.bf16.mxu0 0
    %809 = vmatpush1.bf16.msra.mxu0 0
    %810 = vmatprep.subr.bf16.mxu0 0
    %811 = vmatpush1.bf16.msra.mxu0 0
    %812 = vmatprep.mubr.bf16.mxu0 0
    %813 = vmatmul.mubr.bf16.gmra.mrb[0].mxu0 %v779
    %v814 = vpop.f32.mrb[0].mxu0
    %v815 = vadd.f32 0.0, %v814
    %v816 = vpop.f32.mrb[0].mxu0
    %v817 = vpop.f32.mrb[0].mxu0
    %v818 = vpop.f32.mrb[0].mxu0
    %819 = vdwg.mxu0
    %s820 = scalar_lea.vmem [#allocation2], 24
    %v821 = vld [vmem:[%s820] sm:$0xff]
    %822 = vmatprep.subr.bf16.mxu0 0
    %823 = vmatpush1.bf16.msra.mxu0 %v374
    %824 = vmatprep.subr.bf16.mxu0 0
    %825 = vmatpush1.bf16.msra.mxu0 %v375
    %826 = vmatprep.subr.bf16.mxu0 0
    %827 = vmatpush1.bf16.msra.mxu0 %v376
    %828 = vmatprep.subr.bf16.mxu0 0
    %829 = vmatpush1.bf16.msra.mxu0 %v377
    %830 = vmatprep.subr.bf16.mxu0 0
    %831 = vmatpush1.bf16.msra.mxu0 %v378
    %832 = vmatprep.subr.bf16.mxu0 0
    %833 = vmatpush1.bf16.msra.mxu0 %v379
    %834 = vmatprep.subr.bf16.mxu0 0
    %835 = vmatpush1.bf16.msra.mxu0 %v380
    %836 = vmatprep.subr.bf16.mxu0 0
    %837 = vmatpush1.bf16.msra.mxu0 %v381
    %838 = vmatprep.subr.bf16.mxu0 0
    %839 = vmatpush1.bf16.msra.mxu0 0
    %840 = vmatprep.subr.bf16.mxu0 0
    %841 = vmatpush1.bf16.msra.mxu0 0
    %842 = vmatprep.subr.bf16.mxu0 0
    %843 = vmatpush1.bf16.msra.mxu0 0
    %844 = vmatprep.subr.bf16.mxu0 0
    %845 = vmatpush1.bf16.msra.mxu0 0
    %846 = vmatprep.subr.bf16.mxu0 0
    %847 = vmatpush1.bf16.msra.mxu0 0
    %848 = vmatprep.subr.bf16.mxu0 0
    %849 = vmatpush1.bf16.msra.mxu0 0
    %850 = vmatprep.subr.bf16.mxu0 0
    %851 = vmatpush1.bf16.msra.mxu0 0
    %852 = vmatprep.subr.bf16.mxu0 0
    %853 = vmatpush1.bf16.msra.mxu0 0
    %854 = vmatprep.mubr.bf16.mxu0 0
    %855 = vmatmul.mubr.bf16.gmra.mrb[0].mxu0 %v736
    %v856 = vpop.f32.mrb[0].mxu0
    %v857 = vadd.f32 0.0, %v856
    %v858 = vpop.f32.mrb[0].mxu0
    %v859 = vpop.f32.mrb[0].mxu0
    %v860 = vpop.f32.mrb[0].mxu0
    %861 = vdwg.mxu0
    %v862 = vadd.f32 %v821, %v857
    %v863 = vtanh.pop %v862
    %v864 = vpack.c.bf16 %v863, %v863
    %865 = vmatprep.subr.bf16.mxu0 0
    %866 = vmatpush1.bf16.msra.mxu0 %v465
    %867 = vmatprep.subr.bf16.mxu0 0
    %868 = vmatpush1.bf16.msra.mxu0 %v466
    %869 = vmatprep.subr.bf16.mxu0 0
    %870 = vmatpush1.bf16.msra.mxu0 %v467
    %871 = vmatprep.subr.bf16.mxu0 0
    %872 = vmatpush1.bf16.msra.mxu0 %v468
    %873 = vmatprep.subr.bf16.mxu0 0
    %874 = vmatpush1.bf16.msra.mxu0 %v469
    %875 = vmatprep.subr.bf16.mxu0 0
    %876 = vmatpush1.bf16.msra.mxu0 %v470
    %877 = vmatprep.subr.bf16.mxu0 0
    %878 = vmatpush1.bf16.msra.mxu0 %v471
    %879 = vmatprep.subr.bf16.mxu0 0
    %880 = vmatpush1.bf16.msra.mxu0 %v472
    %881 = vmatprep.subr.bf16.mxu0 0
    %882 = vmatpush1.bf16.msra.mxu0 0
    %883 = vmatprep.subr.bf16.mxu0 0
    %884 = vmatpush1.bf16.msra.mxu0 0
    %885 = vmatprep.subr.bf16.mxu0 0
    %886 = vmatpush1.bf16.msra.mxu0 0
    %887 = vmatprep.subr.bf16.mxu0 0
    %888 = vmatpush1.bf16.msra.mxu0 0
    %889 = vmatprep.subr.bf16.mxu0 0
    %890 = vmatpush1.bf16.msra.mxu0 0
    %891 = vmatprep.subr.bf16.mxu0 0
    %892 = vmatpush1.bf16.msra.mxu0 0
    %893 = vmatprep.subr.bf16.mxu0 0
    %894 = vmatpush1.bf16.msra.mxu0 0
    %895 = vmatprep.subr.bf16.mxu0 0
    %896 = vmatpush1.bf16.msra.mxu0 0
    %897 = vmatprep.mubr.bf16.mxu0 0
    %898 = vmatmul.mubr.bf16.gmra.mrb[0].mxu0 %v864
    %v899 = vpop.f32.mrb[0].mxu0
    %v900 = vadd.f32 %v815, %v899
    %v901 = vpop.f32.mrb[0].mxu0
    %v902 = vpop.f32.mrb[0].mxu0
    %v903 = vpop.f32.mrb[0].mxu0
    %904 = vdwg.mxu0
    %v905 = vadd.f32 %v900, %v252
    %v906 = vtanh.pop %v905
    %v907 = vpack.c.bf16 %v906, %v906
    %908 = vmatprep.subr.bf16.mxu0 0
    %909 = vmatpush1.bf16.msra.mxu0 %v285
    %910 = vmatprep.subr.bf16.mxu0 0
    %911 = vmatpush1.bf16.msra.mxu0 %v286
    %912 = vmatprep.subr.bf16.mxu0 0
    %913 = vmatpush1.bf16.msra.mxu0 %v287
    %914 = vmatprep.subr.bf16.mxu0 0
    %915 = vmatpush1.bf16.msra.mxu0 %v288
    %916 = vmatprep.subr.bf16.mxu0 0
    %917 = vmatpush1.bf16.msra.mxu0 %v289
    %918 = vmatprep.subr.bf16.mxu0 0
    %919 = vmatpush1.bf16.msra.mxu0 %v290
    %920 = vmatprep.subr.bf16.mxu0 0
    %921 = vmatpush1.bf16.msra.mxu0 %v291
    %922 = vmatprep.subr.bf16.mxu0 0
    %923 = vmatpush1.bf16.msra.mxu0 %v292
    %924 = vmatprep.subr.bf16.mxu0 0
    %925 = vmatpush1.bf16.msra.mxu0 0
    %926 = vmatprep.subr.bf16.mxu0 0
    %927 = vmatpush1.bf16.msra.mxu0 0
    %928 = vmatprep.subr.bf16.mxu0 0
    %929 = vmatpush1.bf16.msra.mxu0 0
    %930 = vmatprep.subr.bf16.mxu0 0
    %931 = vmatpush1.bf16.msra.mxu0 0
    %932 = vmatprep.subr.bf16.mxu0 0
    %933 = vmatpush1.bf16.msra.mxu0 0
    %934 = vmatprep.subr.bf16.mxu0 0
    %935 = vmatpush1.bf16.msra.mxu0 0
    %936 = vmatprep.subr.bf16.mxu0 0
    %937 = vmatpush1.bf16.msra.mxu0 0
    %938 = vmatprep.subr.bf16.mxu0 0
    %939 = vmatpush1.bf16.msra.mxu0 0
    %940 = vmatprep.mubr.bf16.mxu0 0
    %941 = vmatmul.mubr.bf16.gmra.mrb[0].mxu0 %v907
    %v942 = vpop.f32.mrb[0].mxu0
    %v943 = vadd.f32 0.0, %v942
    %v944 = vpop.f32.mrb[0].mxu0
    %v945 = vpop.f32.mrb[0].mxu0
    %v946 = vpop.f32.mrb[0].mxu0
    %947 = vdwg.mxu0
    %s948 = scalar_lea.vmem [#allocation2], 32
    %v949 = vld [vmem:[%s948] sm:$0xff]
    %950 = vmatprep.subr.bf16.mxu0 0
    %951 = vmatpush1.bf16.msra.mxu0 %v374
    %952 = vmatprep.subr.bf16.mxu0 0
    %953 = vmatpush1.bf16.msra.mxu0 %v375
    %954 = vmatprep.subr.bf16.mxu0 0
    %955 = vmatpush1.bf16.msra.mxu0 %v376
    %956 = vmatprep.subr.bf16.mxu0 0
    %957 = vmatpush1.bf16.msra.mxu0 %v377
    %958 = vmatprep.subr.bf16.mxu0 0
    %959 = vmatpush1.bf16.msra.mxu0 %v378
    %960 = vmatprep.subr.bf16.mxu0 0
    %961 = vmatpush1.bf16.msra.mxu0 %v379
    %962 = vmatprep.subr.bf16.mxu0 0
    %963 = vmatpush1.bf16.msra.mxu0 %v380
    %964 = vmatprep.subr.bf16.mxu0 0
    %965 = vmatpush1.bf16.msra.mxu0 %v381
    %966 = vmatprep.subr.bf16.mxu0 0
    %967 = vmatpush1.bf16.msra.mxu0 0
    %968 = vmatprep.subr.bf16.mxu0 0
    %969 = vmatpush1.bf16.msra.mxu0 0
    %970 = vmatprep.subr.bf16.mxu0 0
    %971 = vmatpush1.bf16.msra.mxu0 0
    %972 = vmatprep.subr.bf16.mxu0 0
    %973 = vmatpush1.bf16.msra.mxu0 0
    %974 = vmatprep.subr.bf16.mxu0 0
    %975 = vmatpush1.bf16.msra.mxu0 0
    %976 = vmatprep.subr.bf16.mxu0 0
    %977 = vmatpush1.bf16.msra.mxu0 0
    %978 = vmatprep.subr.bf16.mxu0 0
    %979 = vmatpush1.bf16.msra.mxu0 0
    %980 = vmatprep.subr.bf16.mxu0 0
    %981 = vmatpush1.bf16.msra.mxu0 0
    %982 = vmatprep.mubr.bf16.mxu0 0
    %983 = vmatmul.mubr.bf16.gmra.mrb[0].mxu0 %v864
    %v984 = vpop.f32.mrb[0].mxu0
    %v985 = vadd.f32 0.0, %v984
    %v986 = vpop.f32.mrb[0].mxu0
    %v987 = vpop.f32.mrb[0].mxu0
    %v988 = vpop.f32.mrb[0].mxu0
    %989 = vdwg.mxu0
    %v990 = vadd.f32 %v949, %v985
    %v991 = vtanh.pop %v990
    %v992 = vpack.c.bf16 %v991, %v991
    %993 = vmatprep.subr.bf16.mxu0 0
    %994 = vmatpush1.bf16.msra.mxu0 %v465
    %995 = vmatprep.subr.bf16.mxu0 0
    %996 = vmatpush1.bf16.msra.mxu0 %v466
    %997 = vmatprep.subr.bf16.mxu0 0
    %998 = vmatpush1.bf16.msra.mxu0 %v467
    %999 = vmatprep.subr.bf16.mxu0 0
    %1000 = vmatpush1.bf16.msra.mxu0 %v468
    %1001 = vmatprep.subr.bf16.mxu0 0
    %1002 = vmatpush1.bf16.msra.mxu0 %v469
    %1003 = vmatprep.subr.bf16.mxu0 0
    %1004 = vmatpush1.bf16.msra.mxu0 %v470
    %1005 = vmatprep.subr.bf16.mxu0 0
    %1006 = vmatpush1.bf16.msra.mxu0 %v471
    %1007 = vmatprep.subr.bf16.mxu0 0
    %1008 = vmatpush1.bf16.msra.mxu0 %v472
    %1009 = vmatprep.subr.bf16.mxu0 0
    %1010 = vmatpush1.bf16.msra.mxu0 0
    %1011 = vmatprep.subr.bf16.mxu0 0
    %1012 = vmatpush1.bf16.msra.mxu0 0
    %1013 = vmatprep.subr.bf16.mxu0 0
    %1014 = vmatpush1.bf16.msra.mxu0 0
    %1015 = vmatprep.subr.bf16.mxu0 0
    %1016 = vmatpush1.bf16.msra.mxu0 0
    %1017 = vmatprep.subr.bf16.mxu0 0
    %1018 = vmatpush1.bf16.msra.mxu0 0
    %1019 = vmatprep.subr.bf16.mxu0 0
    %1020 = vmatpush1.bf16.msra.mxu0 0
    %1021 = vmatprep.subr.bf16.mxu0 0
    %1022 = vmatpush1.bf16.msra.mxu0 0
    %1023 = vmatprep.subr.bf16.mxu0 0
    %1024 = vmatpush1.bf16.msra.mxu0 0
    %1025 = vmatprep.mubr.bf16.mxu0 0
    %1026 = vmatmul.mubr.bf16.gmra.mrb[0].mxu0 %v992
    %v1027 = vpop.f32.mrb[0].mxu0
    %v1028 = vadd.f32 %v943, %v1027
    %v1029 = vpop.f32.mrb[0].mxu0
    %v1030 = vpop.f32.mrb[0].mxu0
    %v1031 = vpop.f32.mrb[0].mxu0
    %1032 = vdwg.mxu0
    %v1033 = vadd.f32 %v1028, %v252
    %v1034 = vtanh.pop %v1033
    %v1035 = vpack.c.bf16 %v1034, %v1034
    %1036 = vmatprep.subr.bf16.mxu0 0
    %1037 = vmatpush1.bf16.msra.mxu0 %v285
    %1038 = vmatprep.subr.bf16.mxu0 0
    %1039 = vmatpush1.bf16.msra.mxu0 %v286
    %1040 = vmatprep.subr.bf16.mxu0 0
    %1041 = vmatpush1.bf16.msra.mxu0 %v287
    %1042 = vmatprep.subr.bf16.mxu0 0
    %1043 = vmatpush1.bf16.msra.mxu0 %v288
    %1044 = vmatprep.subr.bf16.mxu0 0
    %1045 = vmatpush1.bf16.msra.mxu0 %v289
    %1046 = vmatprep.subr.bf16.mxu0 0
    %1047 = vmatpush1.bf16.msra.mxu0 %v290
    %1048 = vmatprep.subr.bf16.mxu0 0
    %1049 = vmatpush1.bf16.msra.mxu0 %v291
    %1050 = vmatprep.subr.bf16.mxu0 0
    %1051 = vmatpush1.bf16.msra.mxu0 %v292
    %1052 = vmatprep.subr.bf16.mxu0 0
    %1053 = vmatpush1.bf16.msra.mxu0 0
    %1054 = vmatprep.subr.bf16.mxu0 0
    %1055 = vmatpush1.bf16.msra.mxu0 0
    %1056 = vmatprep.subr.bf16.mxu0 0
    %1057 = vmatpush1.bf16.msra.mxu0 0
    %1058 = vmatprep.subr.bf16.mxu0 0
    %1059 = vmatpush1.bf16.msra.mxu0 0
    %1060 = vmatprep.subr.bf16.mxu0 0
    %1061 = vmatpush1.bf16.msra.mxu0 0
    %1062 = vmatprep.subr.bf16.mxu0 0
    %1063 = vmatpush1.bf16.msra.mxu0 0
    %1064 = vmatprep.subr.bf16.mxu0 0
    %1065 = vmatpush1.bf16.msra.mxu0 0
    %1066 = vmatprep.subr.bf16.mxu0 0
    %1067 = vmatpush1.bf16.msra.mxu0 0
    %1068 = vmatprep.mubr.bf16.mxu0 0
    %1069 = vmatmul.mubr.bf16.gmra.mrb[0].mxu0 %v1035
    %v1070 = vpop.f32.mrb[0].mxu0
    %v1071 = vadd.f32 0.0, %v1070
    %v1072 = vpop.f32.mrb[0].mxu0
    %v1073 = vpop.f32.mrb[0].mxu0
    %v1074 = vpop.f32.mrb[0].mxu0
    %1075 = vdwg.mxu0
    %s1076 = scalar_lea.vmem [#allocation2], 40
    %v1077 = vld [vmem:[%s1076] sm:$0xff]
    %1078 = vmatprep.subr.bf16.mxu0 0
    %1079 = vmatpush1.bf16.msra.mxu0 %v374
    %1080 = vmatprep.subr.bf16.mxu0 0
    %1081 = vmatpush1.bf16.msra.mxu0 %v375
    %1082 = vmatprep.subr.bf16.mxu0 0
    %1083 = vmatpush1.bf16.msra.mxu0 %v376
    %1084 = vmatprep.subr.bf16.mxu0 0
    %1085 = vmatpush1.bf16.msra.mxu0 %v377
    %1086 = vmatprep.subr.bf16.mxu0 0
    %1087 = vmatpush1.bf16.msra.mxu0 %v378
    %1088 = vmatprep.subr.bf16.mxu0 0
    %1089 = vmatpush1.bf16.msra.mxu0 %v379
    %1090 = vmatprep.subr.bf16.mxu0 0
    %1091 = vmatpush1.bf16.msra.mxu0 %v380
    %1092 = vmatprep.subr.bf16.mxu0 0
    %1093 = vmatpush1.bf16.msra.mxu0 %v381
    %1094 = vmatprep.subr.bf16.mxu0 0
    %1095 = vmatpush1.bf16.msra.mxu0 0
    %1096 = vmatprep.subr.bf16.mxu0 0
    %1097 = vmatpush1.bf16.msra.mxu0 0
    %1098 = vmatprep.subr.bf16.mxu0 0
    %1099 = vmatpush1.bf16.msra.mxu0 0
    %1100 = vmatprep.subr.bf16.mxu0 0
    %1101 = vmatpush1.bf16.msra.mxu0 0
    %1102 = vmatprep.subr.bf16.mxu0 0
    %1103 = vmatpush1.bf16.msra.mxu0 0
    %1104 = vmatprep.subr.bf16.mxu0 0
    %1105 = vmatpush1.bf16.msra.mxu0 0
    %1106 = vmatprep.subr.bf16.mxu0 0
    %1107 = vmatpush1.bf16.msra.mxu0 0
    %1108 = vmatprep.subr.bf16.mxu0 0
    %1109 = vmatpush1.bf16.msra.mxu0 0
    %1110 = vmatprep.mubr.bf16.mxu0 0
    %1111 = vmatmul.mubr.bf16.gmra.mrb[0].mxu0 %v992
    %v1112 = vpop.f32.mrb[0].mxu0
    %v1113 = vadd.f32 0.0, %v1112
    %v1114 = vpop.f32.mrb[0].mxu0
    %v1115 = vpop.f32.mrb[0].mxu0
    %v1116 = vpop.f32.mrb[0].mxu0
    %1117 = vdwg.mxu0
    %v1118 = vadd.f32 %v1077, %v1113
    %v1119 = vtanh.pop %v1118
    %v1120 = vpack.c.bf16 %v1119, %v1119
    %1121 = vmatprep.subr.bf16.mxu0 0
    %1122 = vmatpush1.bf16.msra.mxu0 %v465
    %1123 = vmatprep.subr.bf16.mxu0 0
    %1124 = vmatpush1.bf16.msra.mxu0 %v466
    %1125 = vmatprep.subr.bf16.mxu0 0
    %1126 = vmatpush1.bf16.msra.mxu0 %v467
    %1127 = vmatprep.subr.bf16.mxu0 0
    %1128 = vmatpush1.bf16.msra.mxu0 %v468
    %1129 = vmatprep.subr.bf16.mxu0 0
    %1130 = vmatpush1.bf16.msra.mxu0 %v469
    %1131 = vmatprep.subr.bf16.mxu0 0
    %1132 = vmatpush1.bf16.msra.mxu0 %v470
    %1133 = vmatprep.subr.bf16.mxu0 0
    %1134 = vmatpush1.bf16.msra.mxu0 %v471
    %1135 = vmatprep.subr.bf16.mxu0 0
    %1136 = vmatpush1.bf16.msra.mxu0 %v472
    %1137 = vmatprep.subr.bf16.mxu0 0
    %1138 = vmatpush1.bf16.msra.mxu0 0
    %1139 = vmatprep.subr.bf16.mxu0 0
    %1140 = vmatpush1.bf16.msra.mxu0 0
    %1141 = vmatprep.subr.bf16.mxu0 0
    %1142 = vmatpush1.bf16.msra.mxu0 0
    %1143 = vmatprep.subr.bf16.mxu0 0
    %1144 = vmatpush1.bf16.msra.mxu0 0
    %1145 = vmatprep.subr.bf16.mxu0 0
    %1146 = vmatpush1.bf16.msra.mxu0 0
    %1147 = vmatprep.subr.bf16.mxu0 0
    %1148 = vmatpush1.bf16.msra.mxu0 0
    %1149 = vmatprep.subr.bf16.mxu0 0
    %1150 = vmatpush1.bf16.msra.mxu0 0
    %1151 = vmatprep.subr.bf16.mxu0 0
    %1152 = vmatpush1.bf16.msra.mxu0 0
    %1153 = vmatprep.mubr.bf16.mxu0 0
    %1154 = vmatmul.mubr.bf16.gmra.mrb[0].mxu0 %v1120
    %v1155 = vpop.f32.mrb[0].mxu0
    %v1156 = vadd.f32 %v1071, %v1155
    %v1157 = vpop.f32.mrb[0].mxu0
    %v1158 = vpop.f32.mrb[0].mxu0
    %v1159 = vpop.f32.mrb[0].mxu0
    %1160 = vdwg.mxu0
    %v1161 = vadd.f32 %v1156, %v252
    %v1162 = vtanh.pop %v1161
    %v1163 = vpack.c.bf16 %v1162, %v1162
    %1164 = vmatprep.subr.bf16.mxu0 0
    %1165 = vmatpush1.bf16.msra.mxu0 %v285
    %1166 = vmatprep.subr.bf16.mxu0 0
    %1167 = vmatpush1.bf16.msra.mxu0 %v286
    %1168 = vmatprep.subr.bf16.mxu0 0
    %1169 = vmatpush1.bf16.msra.mxu0 %v287
    %1170 = vmatprep.subr.bf16.mxu0 0
    %1171 = vmatpush1.bf16.msra.mxu0 %v288
    %1172 = vmatprep.subr.bf16.mxu0 0
    %1173 = vmatpush1.bf16.msra.mxu0 %v289
    %1174 = vmatprep.subr.bf16.mxu0 0
    %1175 = vmatpush1.bf16.msra.mxu0 %v290
    %1176 = vmatprep.subr.bf16.mxu0 0
    %1177 = vmatpush1.bf16.msra.mxu0 %v291
    %1178 = vmatprep.subr.bf16.mxu0 0
    %1179 = vmatpush1.bf16.msra.mxu0 %v292
    %1180 = vmatprep.subr.bf16.mxu0 0
    %1181 = vmatpush1.bf16.msra.mxu0 0
    %1182 = vmatprep.subr.bf16.mxu0 0
    %1183 = vmatpush1.bf16.msra.mxu0 0
    %1184 = vmatprep.subr.bf16.mxu0 0
    %1185 = vmatpush1.bf16.msra.mxu0 0
    %1186 = vmatprep.subr.bf16.mxu0 0
    %1187 = vmatpush1.bf16.msra.mxu0 0
    %1188 = vmatprep.subr.bf16.mxu0 0
    %1189 = vmatpush1.bf16.msra.mxu0 0
    %1190 = vmatprep.subr.bf16.mxu0 0
    %1191 = vmatpush1.bf16.msra.mxu0 0
    %1192 = vmatprep.subr.bf16.mxu0 0
    %1193 = vmatpush1.bf16.msra.mxu0 0
    %1194 = vmatprep.subr.bf16.mxu0 0
    %1195 = vmatpush1.bf16.msra.mxu0 0
    %1196 = vmatprep.mubr.bf16.mxu0 0
    %1197 = vmatmul.mubr.bf16.gmra.mrb[0].mxu0 %v1163
    %v1198 = vpop.f32.mrb[0].mxu0
    %v1199 = vadd.f32 0.0, %v1198
    %v1200 = vpop.f32.mrb[0].mxu0
    %v1201 = vpop.f32.mrb[0].mxu0
    %v1202 = vpop.f32.mrb[0].mxu0
    %1203 = vdwg.mxu0
    %s1204 = scalar_lea.vmem [#allocation2], 48
    %v1205 = vld [vmem:[%s1204] sm:$0xff]
    %1206 = vmatprep.subr.bf16.mxu0 0
    %1207 = vmatpush1.bf16.msra.mxu0 %v374
    %1208 = vmatprep.subr.bf16.mxu0 0
    %1209 = vmatpush1.bf16.msra.mxu0 %v375
    %1210 = vmatprep.subr.bf16.mxu0 0
    %1211 = vmatpush1.bf16.msra.mxu0 %v376
    %1212 = vmatprep.subr.bf16.mxu0 0
    %1213 = vmatpush1.bf16.msra.mxu0 %v377
    %1214 = vmatprep.subr.bf16.mxu0 0
    %1215 = vmatpush1.bf16.msra.mxu0 %v378
    %1216 = vmatprep.subr.bf16.mxu0 0
    %1217 = vmatpush1.bf16.msra.mxu0 %v379
    %1218 = vmatprep.subr.bf16.mxu0 0
    %1219 = vmatpush1.bf16.msra.mxu0 %v380
    %1220 = vmatprep.subr.bf16.mxu0 0
    %1221 = vmatpush1.bf16.msra.mxu0 %v381
    %1222 = vmatprep.subr.bf16.mxu0 0
    %1223 = vmatpush1.bf16.msra.mxu0 0
    %1224 = vmatprep.subr.bf16.mxu0 0
    %1225 = vmatpush1.bf16.msra.mxu0 0
    %1226 = vmatprep.subr.bf16.mxu0 0
    %1227 = vmatpush1.bf16.msra.mxu0 0
    %1228 = vmatprep.subr.bf16.mxu0 0
    %1229 = vmatpush1.bf16.msra.mxu0 0
    %1230 = vmatprep.subr.bf16.mxu0 0
    %1231 = vmatpush1.bf16.msra.mxu0 0
    %1232 = vmatprep.subr.bf16.mxu0 0
    %1233 = vmatpush1.bf16.msra.mxu0 0
    %1234 = vmatprep.subr.bf16.mxu0 0
    %1235 = vmatpush1.bf16.msra.mxu0 0
    %1236 = vmatprep.subr.bf16.mxu0 0
    %1237 = vmatpush1.bf16.msra.mxu0 0
    %1238 = vmatprep.mubr.bf16.mxu0 0
    %1239 = vmatmul.mubr.bf16.gmra.mrb[0].mxu0 %v1120
    %v1240 = vpop.f32.mrb[0].mxu0
    %v1241 = vadd.f32 0.0, %v1240
    %v1242 = vpop.f32.mrb[0].mxu0
    %v1243 = vpop.f32.mrb[0].mxu0
    %v1244 = vpop.f32.mrb[0].mxu0
    %1245 = vdwg.mxu0
    %v1246 = vadd.f32 %v1205, %v1241
    %v1247 = vtanh.pop %v1246
    %v1248 = vpack.c.bf16 %v1247, %v1247
    %1249 = vmatprep.subr.bf16.mxu0 0
    %1250 = vmatpush1.bf16.msra.mxu0 %v465
    %1251 = vmatprep.subr.bf16.mxu0 0
    %1252 = vmatpush1.bf16.msra.mxu0 %v466
    %1253 = vmatprep.subr.bf16.mxu0 0
    %1254 = vmatpush1.bf16.msra.mxu0 %v467
    %1255 = vmatprep.subr.bf16.mxu0 0
    %1256 = vmatpush1.bf16.msra.mxu0 %v468
    %1257 = vmatprep.subr.bf16.mxu0 0
    %1258 = vmatpush1.bf16.msra.mxu0 %v469
    %1259 = vmatprep.subr.bf16.mxu0 0
    %1260 = vmatpush1.bf16.msra.mxu0 %v470
    %1261 = vmatprep.subr.bf16.mxu0 0
    %1262 = vmatpush1.bf16.msra.mxu0 %v471
    %1263 = vmatprep.subr.bf16.mxu0 0
    %1264 = vmatpush1.bf16.msra.mxu0 %v472
    %1265 = vmatprep.subr.bf16.mxu0 0
    %1266 = vmatpush1.bf16.msra.mxu0 0
    %1267 = vmatprep.subr.bf16.mxu0 0
    %1268 = vmatpush1.bf16.msra.mxu0 0
    %1269 = vmatprep.subr.bf16.mxu0 0
    %1270 = vmatpush1.bf16.msra.mxu0 0
    %1271 = vmatprep.subr.bf16.mxu0 0
    %1272 = vmatpush1.bf16.msra.mxu0 0
    %1273 = vmatprep.subr.bf16.mxu0 0
    %1274 = vmatpush1.bf16.msra.mxu0 0
    %1275 = vmatprep.subr.bf16.mxu0 0
    %1276 = vmatpush1.bf16.msra.mxu0 0
    %1277 = vmatprep.subr.bf16.mxu0 0
    %1278 = vmatpush1.bf16.msra.mxu0 0
    %1279 = vmatprep.subr.bf16.mxu0 0
    %1280 = vmatpush1.bf16.msra.mxu0 0
    %1281 = vmatprep.mubr.bf16.mxu0 0
    %1282 = vmatmul.mubr.bf16.gmra.mrb[0].mxu0 %v1248
    %v1283 = vpop.f32.mrb[0].mxu0
    %v1284 = vadd.f32 %v1199, %v1283
    %v1285 = vpop.f32.mrb[0].mxu0
    %v1286 = vpop.f32.mrb[0].mxu0
    %v1287 = vpop.f32.mrb[0].mxu0
    %1288 = vdwg.mxu0
    %v1289 = vadd.f32 %v1284, %v252
    %v1290 = vtanh.pop %v1289
    %v1291 = vpack.c.bf16 %v1290, %v1290
    %1292 = vmatprep.subr.bf16.mxu0 0
    %1293 = vmatpush1.bf16.msra.mxu0 %v285
    %1294 = vmatprep.subr.bf16.mxu0 0
    %1295 = vmatpush1.bf16.msra.mxu0 %v286
    %1296 = vmatprep.subr.bf16.mxu0 0
    %1297 = vmatpush1.bf16.msra.mxu0 %v287
    %1298 = vmatprep.subr.bf16.mxu0 0
    %1299 = vmatpush1.bf16.msra.mxu0 %v288
    %1300 = vmatprep.subr.bf16.mxu0 0
    %1301 = vmatpush1.bf16.msra.mxu0 %v289
    %1302 = vmatprep.subr.bf16.mxu0 0
    %1303 = vmatpush1.bf16.msra.mxu0 %v290
    %1304 = vmatprep.subr.bf16.mxu0 0
    %1305 = vmatpush1.bf16.msra.mxu0 %v291
    %1306 = vmatprep.subr.bf16.mxu0 0
    %1307 = vmatpush1.bf16.msra.mxu0 %v292
    %1308 = vmatprep.subr.bf16.mxu0 0
    %1309 = vmatpush1.bf16.msra.mxu0 0
    %1310 = vmatprep.subr.bf16.mxu0 0
    %1311 = vmatpush1.bf16.msra.mxu0 0
    %1312 = vmatprep.subr.bf16.mxu0 0
    %1313 = vmatpush1.bf16.msra.mxu0 0
    %1314 = vmatprep.subr.bf16.mxu0 0
    %1315 = vmatpush1.bf16.msra.mxu0 0
    %1316 = vmatprep.subr.bf16.mxu0 0
    %1317 = vmatpush1.bf16.msra.mxu0 0
    %1318 = vmatprep.subr.bf16.mxu0 0
    %1319 = vmatpush1.bf16.msra.mxu0 0
    %1320 = vmatprep.subr.bf16.mxu0 0
    %1321 = vmatpush1.bf16.msra.mxu0 0
    %1322 = vmatprep.subr.bf16.mxu0 0
    %1323 = vmatpush1.bf16.msra.mxu0 0
    %1324 = vmatprep.mubr.bf16.mxu0 0
    %1325 = vmatmul.mubr.bf16.gmra.mrb[0].mxu0 %v1291
    %v1326 = vpop.f32.mrb[0].mxu0
    %v1327 = vadd.f32 0.0, %v1326
    %v1328 = vpop.f32.mrb[0].mxu0
    %v1329 = vpop.f32.mrb[0].mxu0
    %v1330 = vpop.f32.mrb[0].mxu0
    %1331 = vdwg.mxu0
    %s1332 = scalar_lea.vmem [#allocation2], 56
    %v1333 = vld [vmem:[%s1332] sm:$0xff]
    %1334 = vmatprep.subr.bf16.mxu0 0
    %1335 = vmatpush1.bf16.msra.mxu0 %v374
    %1336 = vmatprep.subr.bf16.mxu0 0
    %1337 = vmatpush1.bf16.msra.mxu0 %v375
    %1338 = vmatprep.subr.bf16.mxu0 0
    %1339 = vmatpush1.bf16.msra.mxu0 %v376
    %1340 = vmatprep.subr.bf16.mxu0 0
    %1341 = vmatpush1.bf16.msra.mxu0 %v377
    %1342 = vmatprep.subr.bf16.mxu0 0
    %1343 = vmatpush1.bf16.msra.mxu0 %v378
    %1344 = vmatprep.subr.bf16.mxu0 0
    %1345 = vmatpush1.bf16.msra.mxu0 %v379
    %1346 = vmatprep.subr.bf16.mxu0 0
    %1347 = vmatpush1.bf16.msra.mxu0 %v380
    %1348 = vmatprep.subr.bf16.mxu0 0
    %1349 = vmatpush1.bf16.msra.mxu0 %v381
    %1350 = vmatprep.subr.bf16.mxu0 0
    %1351 = vmatpush1.bf16.msra.mxu0 0
    %1352 = vmatprep.subr.bf16.mxu0 0
    %1353 = vmatpush1.bf16.msra.mxu0 0
    %1354 = vmatprep.subr.bf16.mxu0 0
    %1355 = vmatpush1.bf16.msra.mxu0 0
    %1356 = vmatprep.subr.bf16.mxu0 0
    %1357 = vmatpush1.bf16.msra.mxu0 0
    %1358 = vmatprep.subr.bf16.mxu0 0
    %1359 = vmatpush1.bf16.msra.mxu0 0
    %1360 = vmatprep.subr.bf16.mxu0 0
    %1361 = vmatpush1.bf16.msra.mxu0 0
    %1362 = vmatprep.subr.bf16.mxu0 0
    %1363 = vmatpush1.bf16.msra.mxu0 0
    %1364 = vmatprep.subr.bf16.mxu0 0
    %1365 = vmatpush1.bf16.msra.mxu0 0
    %1366 = vmatprep.mubr.bf16.mxu0 0
    %1367 = vmatmul.mubr.bf16.gmra.mrb[0].mxu0 %v1248
    %v1368 = vpop.f32.mrb[0].mxu0
    %v1369 = vadd.f32 0.0, %v1368
    %v1370 = vpop.f32.mrb[0].mxu0
    %v1371 = vpop.f32.mrb[0].mxu0
    %v1372 = vpop.f32.mrb[0].mxu0
    %1373 = vdwg.mxu0
    %v1374 = vadd.f32 %v1333, %v1369
    %v1375 = vtanh.pop %v1374
    %v1376 = vpack.c.bf16 %v1375, %v1375
    %1377 = vmatprep.subr.bf16.mxu0 0
    %1378 = vmatpush1.bf16.msra.mxu0 %v465
    %1379 = vmatprep.subr.bf16.mxu0 0
    %1380 = vmatpush1.bf16.msra.mxu0 %v466
    %1381 = vmatprep.subr.bf16.mxu0 0
    %1382 = vmatpush1.bf16.msra.mxu0 %v467
    %1383 = vmatprep.subr.bf16.mxu0 0
    %1384 = vmatpush1.bf16.msra.mxu0 %v468
    %1385 = vmatprep.subr.bf16.mxu0 0
    %1386 = vmatpush1.bf16.msra.mxu0 %v469
    %1387 = vmatprep.subr.bf16.mxu0 0
    %1388 = vmatpush1.bf16.msra.mxu0 %v470
    %1389 = vmatprep.subr.bf16.mxu0 0
    %1390 = vmatpush1.bf16.msra.mxu0 %v471
    %1391 = vmatprep.subr.bf16.mxu0 0
    %1392 = vmatpush1.bf16.msra.mxu0 %v472
    %1393 = vmatprep.subr.bf16.mxu0 0
    %1394 = vmatpush1.bf16.msra.mxu0 0
    %1395 = vmatprep.subr.bf16.mxu0 0
    %1396 = vmatpush1.bf16.msra.mxu0 0
    %1397 = vmatprep.subr.bf16.mxu0 0
    %1398 = vmatpush1.bf16.msra.mxu0 0
    %1399 = vmatprep.subr.bf16.mxu0 0
    %1400 = vmatpush1.bf16.msra.mxu0 0
    %1401 = vmatprep.subr.bf16.mxu0 0
    %1402 = vmatpush1.bf16.msra.mxu0 0
    %1403 = vmatprep.subr.bf16.mxu0 0
    %1404 = vmatpush1.bf16.msra.mxu0 0
    %1405 = vmatprep.subr.bf16.mxu0 0
    %1406 = vmatpush1.bf16.msra.mxu0 0
    %1407 = vmatprep.subr.bf16.mxu0 0
    %1408 = vmatpush1.bf16.msra.mxu0 0
    %1409 = vmatprep.mubr.bf16.mxu0 0
    %1410 = vmatmul.mubr.bf16.gmra.mrb[0].mxu0 %v1376
    %v1411 = vpop.f32.mrb[0].mxu0
    %v1412 = vadd.f32 %v1327, %v1411
    %v1413 = vpop.f32.mrb[0].mxu0
    %v1414 = vpop.f32.mrb[0].mxu0
    %v1415 = vpop.f32.mrb[0].mxu0
    %1416 = vdwg.mxu0
    %v1417 = vadd.f32 %v1412, %v252
    %v1418 = vtanh.pop %v1417
    %v1419 = vpack.c.bf16 %v1418, %v1418
    %v1420 = vld [vmem:[#allocation13] sm:$0xf]
    %v1421 = vld [vmem:[#allocation13 + $0x4] sm:$0xf]
    %v1422 = vld [vmem:[#allocation13 + $0x8] sm:$0xf]
    %v1423 = vld [vmem:[#allocation13 + $0xc] sm:$0xf]
    %v1424 = vld [vmem:[#allocation13 + $0x10] sm:$0xf]
    %v1425 = vld [vmem:[#allocation13 + $0x14] sm:$0xf]
    %v1426 = vld [vmem:[#allocation13 + $0x18] sm:$0xf]
    %v1427 = vld [vmem:[#allocation13 + $0x1c] sm:$0xf]
    %v1428 = vld [vmem:[#allocation13 + $0x20] sm:$0xf]
    %v1429 = vld [vmem:[#allocation13 + $0x24] sm:$0xf]
    %v1430 = vld [vmem:[#allocation13 + $0x28] sm:$0xf]
    %v1431 = vld [vmem:[#allocation13 + $0x2c] sm:$0xf]
    %v1432 = vld [vmem:[#allocation13 + $0x30] sm:$0xf]
    %v1433 = vld [vmem:[#allocation13 + $0x34] sm:$0xf]
    %v1434 = vld [vmem:[#allocation13 + $0x38] sm:$0xf]
    %v1435 = vld [vmem:[#allocation13 + $0x3c] sm:$0xf]
    %v1436 = vld [vmem:[#allocation15] sm:$0xff]
    %v1453 = vunpack.c.l.b16 %v1420
    %v1454 = vunpack.c.l.b16 %v1421
    %v1455 = vunpack.c.l.b16 %v1422
    %v1456 = vunpack.c.l.b16 %v1423
    %v1457 = vunpack.c.l.b16 %v1424
    %v1458 = vunpack.c.l.b16 %v1425
    %v1459 = vunpack.c.l.b16 %v1426
    %v1460 = vunpack.c.l.b16 %v1427
    %v1461 = vunpack.c.l.b16 %v1428
    %v1462 = vunpack.c.l.b16 %v1429
    %v1463 = vunpack.c.l.b16 %v1430
    %v1464 = vunpack.c.l.b16 %v1431
    %v1465 = vunpack.c.l.b16 %v1432
    %v1466 = vunpack.c.l.b16 %v1433
    %v1467 = vunpack.c.l.b16 %v1434
    %v1468 = vunpack.c.l.b16 %v1435
    %v1469 = vpack.c.b16 %v1454, %v1453
    %v1470 = vpack.c.b16 %v1456, %v1455
    %v1471 = vpack.c.b16 %v1458, %v1457
    %v1472 = vpack.c.b16 %v1460, %v1459
    %v1473 = vpack.c.b16 %v1462, %v1461
    %v1474 = vpack.c.b16 %v1464, %v1463
    %v1475 = vpack.c.b16 %v1466, %v1465
    %v1476 = vpack.c.b16 %v1468, %v1467
    %1485 = vmatprep.subr.bf16.mxu0 0
    %1486 = vmatpush1.bf16.msra.mxu0 %v1469
    %1487 = vmatprep.subr.bf16.mxu0 0
    %1488 = vmatpush1.bf16.msra.mxu0 %v1470
    %1489 = vmatprep.subr.bf16.mxu0 0
    %1490 = vmatpush1.bf16.msra.mxu0 %v1471
    %1491 = vmatprep.subr.bf16.mxu0 0
    %1492 = vmatpush1.bf16.msra.mxu0 %v1472
    %1493 = vmatprep.subr.bf16.mxu0 0
    %1494 = vmatpush1.bf16.msra.mxu0 %v1473
    %1495 = vmatprep.subr.bf16.mxu0 0
    %1496 = vmatpush1.bf16.msra.mxu0 %v1474
    %1497 = vmatprep.subr.bf16.mxu0 0
    %1498 = vmatpush1.bf16.msra.mxu0 %v1475
    %1499 = vmatprep.subr.bf16.mxu0 0
    %1500 = vmatpush1.bf16.msra.mxu0 %v1476
    %1501 = vmatprep.subr.bf16.mxu0 0
    %1502 = vmatpush1.bf16.msra.mxu0 0
    %1503 = vmatprep.subr.bf16.mxu0 0
    %1504 = vmatpush1.bf16.msra.mxu0 0
    %1505 = vmatprep.subr.bf16.mxu0 0
    %1506 = vmatpush1.bf16.msra.mxu0 0
    %1507 = vmatprep.subr.bf16.mxu0 0
    %1508 = vmatpush1.bf16.msra.mxu0 0
    %1509 = vmatprep.subr.bf16.mxu0 0
    %1510 = vmatpush1.bf16.msra.mxu0 0
    %1511 = vmatprep.subr.bf16.mxu0 0
    %1512 = vmatpush1.bf16.msra.mxu0 0
    %1513 = vmatprep.subr.bf16.mxu0 0
    %1514 = vmatpush1.bf16.msra.mxu0 0
    %1515 = vmatprep.subr.bf16.mxu0 0
    %1516 = vmatpush1.bf16.msra.mxu0 0
    %1517 = vmatprep.mubr.bf16.mxu0 0
    %1518 = vmatmul.mubr.bf16.gmra.mrb[0].mxu0 %v1419
    %v1519 = vpop.f32.mrb[0].mxu0
    %v1520 = vadd.f32 %v1436, %v1519
    %v1521 = vpop.f32.mrb[0].mxu0
    %v1522 = vpop.f32.mrb[0].mxu0
    %v1523 = vpop.f32.mrb[0].mxu0
    %1524 = vdwg.mxu0
    %1525 = vst [vmem:[%s8] sm:$0xff] %v1520
    // Predicated region
    $region66: #{rnn_model_forward.1} parent=1 // pred_check
      _
    $region67: #{rnn_model_forward.1} parent=1 // pred_check_branch
      %1527 = sbr.rel (0) target = $region69
    $region68: #{rnn_model_forward.1} parent=1 // pred_region
      _
    $region69: #{rnn_model_forward.1} parent=1 // pred_fallthru
      _
    // Predicated region
    $region70: #{rnn_model_forward.1} parent=1 // pred_check
      _
    $region71: #{rnn_model_forward.1} parent=1 // pred_check_branch
      %1529 = sbr.rel (0) target = $region73
    $region72: #{rnn_model_forward.1} parent=1 // pred_region
      _
    $region73: #{rnn_model_forward.1} parent=1 // pred_fallthru
      _
    %1530 = vsyncpa [#allocation4], 1
    %1531 = vsyncpa [#allocation8], 1
    %1532 = vsyncpa [#allocation11], 1
    %1533 = vsyncpa [#allocation14], 1
    %1534 = vsyncpa [#allocation5], 1

</llo_original>
